<compile_context>
chip_gen: v7x
topology: tpu7x:2x2x1
jax: 0.10.0
libtpu: 0.0.40
codegen_flags: <defaults>
</compile_context>

<pallas_src>
import jax
import jax.numpy as jnp
from jax import lax
from jax.experimental import pallas as pl
from jax.experimental.pallas import tpu as pltpu  # noqa: F401  (TPU backend params if needed)

# ----------------------------- model dims (small) -----------------------------
T = 8            # seq_len
B = 2            # batch
C = 32           # embedding_dim
H = 4            # num_attention_heads
HD = C // H      # head_dim
FFN = 64         # ffn_embedding_dim
EPS = 1e-5
SCALING = HD ** -0.5


def _layernorm(x, gamma, beta):
    mu = jnp.mean(x, axis=-1, keepdims=True)
    var = jnp.mean((x - mu) * (x - mu), axis=-1, keepdims=True)
    return (x - mu) * lax.rsqrt(var + EPS) * gamma + beta


# --------------------- fused transformer-encoder-layer kernel -----------------
def wavlm_layer_kernel(x_ref, wq_ref, bq_ref, wk_ref, bk_ref, wv_ref, bv_ref,
                       wo_ref, bo_ref, g1_ref, be1_ref, w1_ref, b1_ref,
                       w2_ref, b2_ref, g2_ref, be2_ref, o_ref):
    """Single-invocation fused layer.

    x_ref: (T, B, C) input (fairseq layout, loaded whole into VMEM)
    o_ref: (T, B*C)  output slab; wrapper reshapes to (T, B, C)
    weights stored as (in, out) (i.e. torch W.T); biases as (1, dim)
    """
    x_tbc = x_ref[...]                                            # (T, B, C)

    # Fold (T, B) into rows with batch-major (b, t) ordering so per-batch head
    # grouping is a plain leading-dim reshape.  B=2 static slices + sublane cat.
    x2 = jnp.concatenate([x_tbc[:, b, :] for b in range(B)], axis=0)   # (B*T, C)

    # --- QKV projections, batch folded into the M/sublane dimension ----------
    q = (jnp.dot(x2, wq_ref[...], preferred_element_type=jnp.float32)
         + bq_ref[...]) * SCALING
    k = jnp.dot(x2, wk_ref[...], preferred_element_type=jnp.float32) + bk_ref[...]
    v = jnp.dot(x2, wv_ref[...], preferred_element_type=jnp.float32) + bv_ref[...]

    q3 = q.reshape(B, T, C)
    k3 = k.reshape(B, T, C)
    v3 = v.reshape(B, T, C)

    # Stack all heads along a leading batch axis -> one batched dot for scores
    # and one for PV instead of a per-(b,h) loop of tiny 2-D matmuls.
    def split_heads(z):                                           # (B,T,C) -> (H*B,T,HD)
        return jnp.concatenate(
            [z[:, :, h * HD:(h + 1) * HD] for h in range(H)], axis=0)

    qh = split_heads(q3)
    kh = split_heads(k3)
    vh = split_heads(v3)

    s = jnp.einsum('bqd,bkd->bqk', qh, kh,
                   preferred_element_type=jnp.float32)            # (H*B, T, T)
    s = s - jnp.max(s, axis=-1, keepdims=True)
    p = jnp.exp(s)
    # EUP approximate reciprocal instead of a VALU divide.
    p = p * pl.reciprocal(jnp.sum(p, axis=-1, keepdims=True), approx=True)
    oh = jnp.einsum('bqk,bkd->bqd', p, vh,
                    preferred_element_type=jnp.float32)           # (H*B, T, HD)

    # Merge heads back: columns in head order, rows back to (b, t).
    o3 = jnp.concatenate([oh[h * B:(h + 1) * B] for h in range(H)], axis=-1)  # (B,T,C)
    attn = (jnp.dot(o3.reshape(B * T, C), wo_ref[...],
                    preferred_element_type=jnp.float32) + bo_ref[...])        # (B*T,C)

    # --- post-norm: residual + LN -> FFN (relu) -> residual + LN --------------
    h0 = _layernorm(x2 + attn, g1_ref[...], be1_ref[...])
    f = jnp.maximum(jnp.dot(h0, w1_ref[...],
                            preferred_element_type=jnp.float32) + b1_ref[...], 0.0)
    f = jnp.dot(f, w2_ref[...], preferred_element_type=jnp.float32) + b2_ref[...]
    y = _layernorm(h0 + f, g2_ref[...], be2_ref[...])             # (B*T, C), rows (b,t)

    # Fold back to (t, b) ordering with a lane concatenation so the wrapper only
    # needs a free contiguous reshape (no transpose): row t = [batch0 C | batch1 C].
    y_wide = jnp.concatenate([y[b * T:(b + 1) * T, :] for b in range(B)],
                             axis=-1)                             # (T, B*C)
    o_ref[...] = y_wide


# ----------------------------- full layer wrapper ------------------------------
def transformer_layer(x_tbc, params):
    """x_tbc: (T, B, C) float32.  Returns (y_tbc, attn=None, pos_bias=None)."""
    out = pl.pallas_call(
        wavlm_layer_kernel,
        out_shape=jax.ShapeDtypeStruct((T, B * C), jnp.float32),
    )(x_tbc,
      params["wq"], params["bq"], params["wk"], params["bk"],
      params["wv"], params["bv"], params["wo"], params["bo"],
      params["g1"], params["be1"], params["w1"], params["b1"],
      params["w2"], params["b2"], params["g2"], params["be2"])
    y_tbc = out.reshape(T, B, C)
    # need_weights=False -> attn is None; no relative bias -> pos_bias is None
    return y_tbc, None, None


# ----------------------------- pure-JAX reference ------------------------------
def reference(x_tbc, p):
    x = jnp.transpose(x_tbc, (1, 0, 2))                           # (B, T, C)
    q = (x @ p["wq"] + p["bq"][0]) * SCALING
    k = x @ p["wk"] + p["bk"][0]
    v = x @ p["wv"] + p["bv"][0]
    q = q.reshape(B, T, H, HD).transpose(0, 2, 1, 3)
    k = k.reshape(B, T, H, HD).transpose(0, 2, 1, 3)
    v = v.reshape(B, T, H, HD).transpose(0, 2, 1, 3)
    s = jnp.einsum("bhqd,bhkd->bhqk", q, k)
    pattn = jax.nn.softmax(s, axis=-1)
    o = jnp.einsum("bhqk,bhkd->bhqd", pattn, v)
    o = o.transpose(0, 2, 1, 3).reshape(B, T, C)
    attn = o @ p["wo"] + p["bo"][0]

    def ln(z, g, b):
        mu = jnp.mean(z, -1, keepdims=True)
        var = jnp.mean((z - mu) ** 2, -1, keepdims=True)
        return (z - mu) / jnp.sqrt(var + EPS) * g[0] + b[0]

    h = ln(x + attn, p["g1"], p["be1"])
    res = h
    f = jnp.maximum(h @ p["w1"] + p["b1"][0], 0.0)
    f = f @ p["w2"] + p["b2"][0]
    y = ln(res + f, p["g2"], p["be2"])
    return jnp.transpose(y, (1, 0, 2))


# ----------------------------- param init --------------------------------------
def init_params(key):
    ks = jax.random.split(key, 8)
    scale = 0.05
    p = {
        # attention projections (stored as (in, out), equivalent to torch W.T)
        "wq": scale * jax.random.normal(ks[0], (C, C), jnp.float32),
        "wk": scale * jax.random.normal(ks[1], (C, C), jnp.float32),
        "wv": scale * jax.random.normal(ks[2], (C, C), jnp.float32),
        "wo": scale * jax.random.normal(ks[3], (C, C), jnp.float32),
        "bq": 0.01 * jnp.ones((1, C), jnp.float32),
        "bk": jnp.zeros((1, C), jnp.float32),
        "bv": 0.01 * jnp.ones((1, C), jnp.float32),
        "bo": jnp.zeros((1, C), jnp.float32),
        # layer norms
        "g1": jnp.ones((1, C), jnp.float32),
        "be1": jnp.zeros((1, C), jnp.float32),
        "g2": jnp.ones((1, C), jnp.float32),
        "be2": jnp.zeros((1, C), jnp.float32),
        # FFN
        "w1": scale * jax.random.normal(ks[4], (C, FFN), jnp.float32),
        "b1": 0.01 * jnp.ones((1, FFN), jnp.float32),
        "w2": scale * jax.random.normal(ks[5], (FFN, C), jnp.float32),
        "b2": jnp.zeros((1, C), jnp.float32),
    }
    return p


if __name__ == "__main__":
    key = jax.random.PRNGKey(0)
    kx, kp = jax.random.split(key)
    x = jax.random.normal(kx, (T, B, C), jnp.float32)             # (T, B, C)
    params = init_params(kp)

    y, attn, pos_bias = jax.jit(transformer_layer)(x, params)
    y = jax.block_until_ready(y)

    y_ref = reference(x, params)
    assert y.shape == (T, B, C)
    assert attn is None and pos_bias is None
    max_err = float(jnp.max(jnp.abs(y - y_ref)))
    # tolerance slightly loosened because the softmax uses the EUP approximate
    # reciprocal (pl.reciprocal(..., approx=True))
    assert jnp.allclose(y, y_ref, atol=1e-3, rtol=1e-3), max_err
    print("KERNEL_OK")
</pallas_src>

<mosaic_0001>
module attributes {stable_mosaic.version = 11 : i64} {
  func.func @wavlm_layer_kernel(%arg0: memref<8x2x32xf32, #tpu.memory_space<vmem>>, %arg1: memref<32x32xf32, #tpu.memory_space<vmem>>, %arg2: memref<1x32xf32, #tpu.memory_space<vmem>>, %arg3: memref<32x32xf32, #tpu.memory_space<vmem>>, %arg4: memref<1x32xf32, #tpu.memory_space<vmem>>, %arg5: memref<32x32xf32, #tpu.memory_space<vmem>>, %arg6: memref<1x32xf32, #tpu.memory_space<vmem>>, %arg7: memref<32x32xf32, #tpu.memory_space<vmem>>, %arg8: memref<1x32xf32, #tpu.memory_space<vmem>>, %arg9: memref<1x32xf32, #tpu.memory_space<vmem>>, %arg10: memref<1x32xf32, #tpu.memory_space<vmem>>, %arg11: memref<32x64xf32, #tpu.memory_space<vmem>>, %arg12: memref<1x64xf32, #tpu.memory_space<vmem>>, %arg13: memref<64x32xf32, #tpu.memory_space<vmem>>, %arg14: memref<1x32xf32, #tpu.memory_space<vmem>>, %arg15: memref<1x32xf32, #tpu.memory_space<vmem>>, %arg16: memref<1x32xf32, #tpu.memory_space<vmem>>, %arg17: memref<8x64xf32, #tpu.memory_space<vmem>>) attributes {dimension_semantics = [], scalar_prefetch = 0 : i64, scratch_operands = 0 : i64, tpu.core_type = #tpu.core_type<tc>} {
    %c0 = arith.constant 0 : index
    %c0_0 = arith.constant 0 : index
    %c0_1 = arith.constant 0 : index
    %0 = vector.load %arg0[%c0, %c0_0, %c0_1] : memref<8x2x32xf32, #tpu.memory_space<vmem>>, vector<8x2x32xf32>
    %1 = vector.extract_strided_slice %0 {offsets = [0, 0, 0], sizes = [8, 1, 32], strides = [1, 1, 1]} : vector<8x2x32xf32> to vector<8x1x32xf32>
    %2 = vector.shape_cast %1 : vector<8x1x32xf32> to vector<8x32xf32>
    %3 = vector.extract_strided_slice %0 {offsets = [0, 1, 0], sizes = [8, 1, 32], strides = [1, 1, 1]} : vector<8x2x32xf32> to vector<8x1x32xf32>
    %4 = vector.shape_cast %3 : vector<8x1x32xf32> to vector<8x32xf32>
    %5 = tpu.concatenate %2, %4 in 0 : vector<8x32xf32>, vector<8x32xf32> -> vector<16x32xf32>
    %c0_2 = arith.constant 0 : index
    %c0_3 = arith.constant 0 : index
    %6 = vector.load %arg1[%c0_2, %c0_3] : memref<32x32xf32, #tpu.memory_space<vmem>>, vector<32x32xf32>
    %cst = arith.constant dense<0.000000e+00> : vector<16x32xf32>
    %7 = tpu.matmul %5, %6, %cst {dimension_numbers = #tpu.dot_dimension_numbers<[1], [0], [0], [1], [0, 0, 1, 1], [], []>} : vector<16x32xf32>, vector<32x32xf32>, vector<16x32xf32> -> vector<16x32xf32>
    %c0_4 = arith.constant 0 : index
    %c0_5 = arith.constant 0 : index
    %8 = vector.load %arg2[%c0_4, %c0_5] : memref<1x32xf32, #tpu.memory_space<vmem>>, vector<1x32xf32>
    %9 = vector.broadcast %8 : vector<1x32xf32> to vector<16x32xf32>
    %10 = arith.addf %7, %9 : vector<16x32xf32>
    %cst_6 = arith.constant 0.353553385 : f32
    %11 = vector.broadcast %cst_6 : f32 to vector<16x32xf32>
    %12 = arith.mulf %10, %11 : vector<16x32xf32>
    %c0_7 = arith.constant 0 : index
    %c0_8 = arith.constant 0 : index
    %13 = vector.load %arg3[%c0_7, %c0_8] : memref<32x32xf32, #tpu.memory_space<vmem>>, vector<32x32xf32>
    %cst_9 = arith.constant dense<0.000000e+00> : vector<16x32xf32>
    %14 = tpu.matmul %5, %13, %cst_9 {dimension_numbers = #tpu.dot_dimension_numbers<[1], [0], [0], [1], [0, 0, 1, 1], [], []>} : vector<16x32xf32>, vector<32x32xf32>, vector<16x32xf32> -> vector<16x32xf32>
    %c0_10 = arith.constant 0 : index
    %c0_11 = arith.constant 0 : index
    %15 = vector.load %arg4[%c0_10, %c0_11] : memref<1x32xf32, #tpu.memory_space<vmem>>, vector<1x32xf32>
    %16 = vector.broadcast %15 : vector<1x32xf32> to vector<16x32xf32>
    %17 = arith.addf %14, %16 : vector<16x32xf32>
    %c0_12 = arith.constant 0 : index
    %c0_13 = arith.constant 0 : index
    %18 = vector.load %arg5[%c0_12, %c0_13] : memref<32x32xf32, #tpu.memory_space<vmem>>, vector<32x32xf32>
    %cst_14 = arith.constant dense<0.000000e+00> : vector<16x32xf32>
    %19 = tpu.matmul %5, %18, %cst_14 {dimension_numbers = #tpu.dot_dimension_numbers<[1], [0], [0], [1], [0, 0, 1, 1], [], []>} : vector<16x32xf32>, vector<32x32xf32>, vector<16x32xf32> -> vector<16x32xf32>
    %c0_15 = arith.constant 0 : index
    %c0_16 = arith.constant 0 : index
    %20 = vector.load %arg6[%c0_15, %c0_16] : memref<1x32xf32, #tpu.memory_space<vmem>>, vector<1x32xf32>
    %21 = vector.broadcast %20 : vector<1x32xf32> to vector<16x32xf32>
    %22 = arith.addf %19, %21 : vector<16x32xf32>
    %23 = vector.shape_cast %12 : vector<16x32xf32> to vector<2x8x32xf32>
    %24 = vector.shape_cast %17 : vector<16x32xf32> to vector<2x8x32xf32>
    %25 = vector.shape_cast %22 : vector<16x32xf32> to vector<2x8x32xf32>
    %26 = vector.extract_strided_slice %23 {offsets = [0, 0, 0], sizes = [2, 8, 8], strides = [1, 1, 1]} : vector<2x8x32xf32> to vector<2x8x8xf32>
    %27 = vector.extract_strided_slice %23 {offsets = [0, 0, 8], sizes = [2, 8, 8], strides = [1, 1, 1]} : vector<2x8x32xf32> to vector<2x8x8xf32>
    %28 = vector.extract_strided_slice %23 {offsets = [0, 0, 16], sizes = [2, 8, 8], strides = [1, 1, 1]} : vector<2x8x32xf32> to vector<2x8x8xf32>
    %29 = vector.extract_strided_slice %23 {offsets = [0, 0, 24], sizes = [2, 8, 8], strides = [1, 1, 1]} : vector<2x8x32xf32> to vector<2x8x8xf32>
    %30 = tpu.concatenate %26, %27, %28, %29 in 0 : vector<2x8x8xf32>, vector<2x8x8xf32>, vector<2x8x8xf32>, vector<2x8x8xf32> -> vector<8x8x8xf32>
    %31 = vector.extract_strided_slice %24 {offsets = [0, 0, 0], sizes = [2, 8, 8], strides = [1, 1, 1]} : vector<2x8x32xf32> to vector<2x8x8xf32>
    %32 = vector.extract_strided_slice %24 {offsets = [0, 0, 8], sizes = [2, 8, 8], strides = [1, 1, 1]} : vector<2x8x32xf32> to vector<2x8x8xf32>
    %33 = vector.extract_strided_slice %24 {offsets = [0, 0, 16], sizes = [2, 8, 8], strides = [1, 1, 1]} : vector<2x8x32xf32> to vector<2x8x8xf32>
    %34 = vector.extract_strided_slice %24 {offsets = [0, 0, 24], sizes = [2, 8, 8], strides = [1, 1, 1]} : vector<2x8x32xf32> to vector<2x8x8xf32>
    %35 = tpu.concatenate %31, %32, %33, %34 in 0 : vector<2x8x8xf32>, vector<2x8x8xf32>, vector<2x8x8xf32>, vector<2x8x8xf32> -> vector<8x8x8xf32>
    %36 = vector.extract_strided_slice %25 {offsets = [0, 0, 0], sizes = [2, 8, 8], strides = [1, 1, 1]} : vector<2x8x32xf32> to vector<2x8x8xf32>
    %37 = vector.extract_strided_slice %25 {offsets = [0, 0, 8], sizes = [2, 8, 8], strides = [1, 1, 1]} : vector<2x8x32xf32> to vector<2x8x8xf32>
    %38 = vector.extract_strided_slice %25 {offsets = [0, 0, 16], sizes = [2, 8, 8], strides = [1, 1, 1]} : vector<2x8x32xf32> to vector<2x8x8xf32>
    %39 = vector.extract_strided_slice %25 {offsets = [0, 0, 24], sizes = [2, 8, 8], strides = [1, 1, 1]} : vector<2x8x32xf32> to vector<2x8x8xf32>
    %40 = tpu.concatenate %36, %37, %38, %39 in 0 : vector<2x8x8xf32>, vector<2x8x8xf32>, vector<2x8x8xf32>, vector<2x8x8xf32> -> vector<8x8x8xf32>
    "tpu.trace_start"() <{level = 10 : i32, message = "bqd,bkd->bqk"}> : () -> ()
    %cst_17 = arith.constant dense<0.000000e+00> : vector<8x8x8xf32>
    %41 = tpu.matmul %30, %35, %cst_17 {dimension_numbers = #tpu.dot_dimension_numbers<[2], [2], [1], [1], [0, 0, 0, 1, 1, 1], [0], [0]>} : vector<8x8x8xf32>, vector<8x8x8xf32>, vector<8x8x8xf32> -> vector<8x8x8xf32>
    "tpu.trace_stop"() : () -> ()
    %cst_18 = arith.constant dense<0xFF800000> : vector<8x8xf32>
    %42 = vector.multi_reduction <maximumf>, %41, %cst_18 [2] : vector<8x8x8xf32> to vector<8x8xf32>
    %43 = vector.shape_cast %42 : vector<8x8xf32> to vector<8x8x1xf32>
    %44 = vector.broadcast %43 : vector<8x8x1xf32> to vector<8x8x8xf32>
    %45 = arith.subf %41, %44 : vector<8x8x8xf32>
    %46 = math.exp %45 : vector<8x8x8xf32>
    %cst_19 = arith.constant dense<0.000000e+00> : vector<8x8xf32>
    %47 = vector.multi_reduction <add>, %46, %cst_19 [2] : vector<8x8x8xf32> to vector<8x8xf32>
    %48 = vector.shape_cast %47 : vector<8x8xf32> to vector<8x8x1xf32>
    %49 = tpu.reciprocal %48 {approx = true} : vector<8x8x1xf32> -> vector<8x8x1xf32>
    %50 = vector.broadcast %49 : vector<8x8x1xf32> to vector<8x8x8xf32>
    %51 = arith.mulf %46, %50 : vector<8x8x8xf32>
    "tpu.trace_start"() <{level = 10 : i32, message = "bqk,bkd->bqd"}> : () -> ()
    %cst_20 = arith.constant dense<0.000000e+00> : vector<8x8x8xf32>
    %52 = tpu.matmul %51, %40, %cst_20 {dimension_numbers = #tpu.dot_dimension_numbers<[2], [1], [1], [2], [0, 0, 0, 1, 1, 2], [0], [0]>} : vector<8x8x8xf32>, vector<8x8x8xf32>, vector<8x8x8xf32> -> vector<8x8x8xf32>
    "tpu.trace_stop"() : () -> ()
    %53 = vector.extract_strided_slice %52 {offsets = [0, 0, 0], sizes = [2, 8, 8], strides = [1, 1, 1]} : vector<8x8x8xf32> to vector<2x8x8xf32>
    %54 = vector.extract_strided_slice %52 {offsets = [2, 0, 0], sizes = [2, 8, 8], strides = [1, 1, 1]} : vector<8x8x8xf32> to vector<2x8x8xf32>
    %55 = vector.extract_strided_slice %52 {offsets = [4, 0, 0], sizes = [2, 8, 8], strides = [1, 1, 1]} : vector<8x8x8xf32> to vector<2x8x8xf32>
    %56 = vector.extract_strided_slice %52 {offsets = [6, 0, 0], sizes = [2, 8, 8], strides = [1, 1, 1]} : vector<8x8x8xf32> to vector<2x8x8xf32>
    %57 = tpu.concatenate %53, %54, %55, %56 in 2 : vector<2x8x8xf32>, vector<2x8x8xf32>, vector<2x8x8xf32>, vector<2x8x8xf32> -> vector<2x8x32xf32>
    %58 = vector.shape_cast %57 : vector<2x8x32xf32> to vector<16x32xf32>
    %c0_21 = arith.constant 0 : index
    %c0_22 = arith.constant 0 : index
    %59 = vector.load %arg7[%c0_21, %c0_22] : memref<32x32xf32, #tpu.memory_space<vmem>>, vector<32x32xf32>
    %cst_23 = arith.constant dense<0.000000e+00> : vector<16x32xf32>
    %60 = tpu.matmul %58, %59, %cst_23 {dimension_numbers = #tpu.dot_dimension_numbers<[1], [0], [0], [1], [0, 0, 1, 1], [], []>} : vector<16x32xf32>, vector<32x32xf32>, vector<16x32xf32> -> vector<16x32xf32>
    %c0_24 = arith.constant 0 : index
    %c0_25 = arith.constant 0 : index
    %61 = vector.load %arg8[%c0_24, %c0_25] : memref<1x32xf32, #tpu.memory_space<vmem>>, vector<1x32xf32>
    %62 = vector.broadcast %61 : vector<1x32xf32> to vector<16x32xf32>
    %63 = arith.addf %60, %62 : vector<16x32xf32>
    %64 = arith.addf %5, %63 : vector<16x32xf32>
    %c0_26 = arith.constant 0 : index
    %c0_27 = arith.constant 0 : index
    %65 = vector.load %arg9[%c0_26, %c0_27] : memref<1x32xf32, #tpu.memory_space<vmem>>, vector<1x32xf32>
    %c0_28 = arith.constant 0 : index
    %c0_29 = arith.constant 0 : index
    %66 = vector.load %arg10[%c0_28, %c0_29] : memref<1x32xf32, #tpu.memory_space<vmem>>, vector<1x32xf32>
    %cst_30 = arith.constant dense<0.000000e+00> : vector<16xf32>
    %67 = vector.multi_reduction <add>, %64, %cst_30 [1] : vector<16x32xf32> to vector<16xf32>
    %68 = vector.shape_cast %67 : vector<16xf32> to vector<16x1xf32>
    %cst_31 = arith.constant 3.200000e+01 : f32
    %69 = vector.broadcast %cst_31 : f32 to vector<16x1xf32>
    %70 = arith.divf %68, %69 : vector<16x1xf32>
    %71 = vector.broadcast %70 : vector<16x1xf32> to vector<16x32xf32>
    %72 = arith.subf %64, %71 : vector<16x32xf32>
    %73 = vector.broadcast %70 : vector<16x1xf32> to vector<16x32xf32>
    %74 = arith.subf %64, %73 : vector<16x32xf32>
    %75 = arith.mulf %72, %74 : vector<16x32xf32>
    %cst_32 = arith.constant dense<0.000000e+00> : vector<16xf32>
    %76 = vector.multi_reduction <add>, %75, %cst_32 [1] : vector<16x32xf32> to vector<16xf32>
    %77 = vector.shape_cast %76 : vector<16xf32> to vector<16x1xf32>
    %cst_33 = arith.constant 3.200000e+01 : f32
    %78 = vector.broadcast %cst_33 : f32 to vector<16x1xf32>
    %79 = arith.divf %77, %78 : vector<16x1xf32>
    %80 = vector.broadcast %70 : vector<16x1xf32> to vector<16x32xf32>
    %81 = arith.subf %64, %80 : vector<16x32xf32>
    %cst_34 = arith.constant 9.99999974E-6 : f32
    %82 = vector.broadcast %cst_34 : f32 to vector<16x1xf32>
    %83 = arith.addf %79, %82 : vector<16x1xf32>
    %84 = math.rsqrt %83 : vector<16x1xf32>
    %85 = vector.broadcast %84 : vector<16x1xf32> to vector<16x32xf32>
    %86 = arith.mulf %81, %85 : vector<16x32xf32>
    %87 = vector.broadcast %65 : vector<1x32xf32> to vector<16x32xf32>
    %88 = arith.mulf %86, %87 : vector<16x32xf32>
    %89 = vector.broadcast %66 : vector<1x32xf32> to vector<16x32xf32>
    %90 = arith.addf %88, %89 : vector<16x32xf32>
    %c0_35 = arith.constant 0 : index
    %c0_36 = arith.constant 0 : index
    %91 = vector.load %arg11[%c0_35, %c0_36] : memref<32x64xf32, #tpu.memory_space<vmem>>, vector<32x64xf32>
    %cst_37 = arith.constant dense<0.000000e+00> : vector<16x64xf32>
    %92 = tpu.matmul %90, %91, %cst_37 {dimension_numbers = #tpu.dot_dimension_numbers<[1], [0], [0], [1], [0, 0, 1, 1], [], []>} : vector<16x32xf32>, vector<32x64xf32>, vector<16x64xf32> -> vector<16x64xf32>
    %c0_38 = arith.constant 0 : index
    %c0_39 = arith.constant 0 : index
    %93 = vector.load %arg12[%c0_38, %c0_39] : memref<1x64xf32, #tpu.memory_space<vmem>>, vector<1x64xf32>
    %94 = vector.broadcast %93 : vector<1x64xf32> to vector<16x64xf32>
    %95 = arith.addf %92, %94 : vector<16x64xf32>
    %cst_40 = arith.constant 0.000000e+00 : f32
    %96 = vector.broadcast %cst_40 : f32 to vector<16x64xf32>
    %97 = arith.maximumf %95, %96 : vector<16x64xf32>
    %c0_41 = arith.constant 0 : index
    %c0_42 = arith.constant 0 : index
    %98 = vector.load %arg13[%c0_41, %c0_42] : memref<64x32xf32, #tpu.memory_space<vmem>>, vector<64x32xf32>
    %cst_43 = arith.constant dense<0.000000e+00> : vector<16x32xf32>
    %99 = tpu.matmul %97, %98, %cst_43 {dimension_numbers = #tpu.dot_dimension_numbers<[1], [0], [0], [1], [0, 0, 1, 1], [], []>} : vector<16x64xf32>, vector<64x32xf32>, vector<16x32xf32> -> vector<16x32xf32>
    %c0_44 = arith.constant 0 : index
    %c0_45 = arith.constant 0 : index
    %100 = vector.load %arg14[%c0_44, %c0_45] : memref<1x32xf32, #tpu.memory_space<vmem>>, vector<1x32xf32>
    %101 = vector.broadcast %100 : vector<1x32xf32> to vector<16x32xf32>
    %102 = arith.addf %99, %101 : vector<16x32xf32>
    %103 = arith.addf %90, %102 : vector<16x32xf32>
    %c0_46 = arith.constant 0 : index
    %c0_47 = arith.constant 0 : index
    %104 = vector.load %arg15[%c0_46, %c0_47] : memref<1x32xf32, #tpu.memory_space<vmem>>, vector<1x32xf32>
    %c0_48 = arith.constant 0 : index
    %c0_49 = arith.constant 0 : index
    %105 = vector.load %arg16[%c0_48, %c0_49] : memref<1x32xf32, #tpu.memory_space<vmem>>, vector<1x32xf32>
    %cst_50 = arith.constant dense<0.000000e+00> : vector<16xf32>
    %106 = vector.multi_reduction <add>, %103, %cst_50 [1] : vector<16x32xf32> to vector<16xf32>
    %107 = vector.shape_cast %106 : vector<16xf32> to vector<16x1xf32>
    %cst_51 = arith.constant 3.200000e+01 : f32
    %108 = vector.broadcast %cst_51 : f32 to vector<16x1xf32>
    %109 = arith.divf %107, %108 : vector<16x1xf32>
    %110 = vector.broadcast %109 : vector<16x1xf32> to vector<16x32xf32>
    %111 = arith.subf %103, %110 : vector<16x32xf32>
    %112 = vector.broadcast %109 : vector<16x1xf32> to vector<16x32xf32>
    %113 = arith.subf %103, %112 : vector<16x32xf32>
    %114 = arith.mulf %111, %113 : vector<16x32xf32>
    %cst_52 = arith.constant dense<0.000000e+00> : vector<16xf32>
    %115 = vector.multi_reduction <add>, %114, %cst_52 [1] : vector<16x32xf32> to vector<16xf32>
    %116 = vector.shape_cast %115 : vector<16xf32> to vector<16x1xf32>
    %cst_53 = arith.constant 3.200000e+01 : f32
    %117 = vector.broadcast %cst_53 : f32 to vector<16x1xf32>
    %118 = arith.divf %116, %117 : vector<16x1xf32>
    %119 = vector.broadcast %109 : vector<16x1xf32> to vector<16x32xf32>
    %120 = arith.subf %103, %119 : vector<16x32xf32>
    %cst_54 = arith.constant 9.99999974E-6 : f32
    %121 = vector.broadcast %cst_54 : f32 to vector<16x1xf32>
    %122 = arith.addf %118, %121 : vector<16x1xf32>
    %123 = math.rsqrt %122 : vector<16x1xf32>
    %124 = vector.broadcast %123 : vector<16x1xf32> to vector<16x32xf32>
    %125 = arith.mulf %120, %124 : vector<16x32xf32>
    %126 = vector.broadcast %104 : vector<1x32xf32> to vector<16x32xf32>
    %127 = arith.mulf %125, %126 : vector<16x32xf32>
    %128 = vector.broadcast %105 : vector<1x32xf32> to vector<16x32xf32>
    %129 = arith.addf %127, %128 : vector<16x32xf32>
    %130 = vector.extract_strided_slice %129 {offsets = [0, 0], sizes = [8, 32], strides = [1, 1]} : vector<16x32xf32> to vector<8x32xf32>
    %131 = vector.extract_strided_slice %129 {offsets = [8, 0], sizes = [8, 32], strides = [1, 1]} : vector<16x32xf32> to vector<8x32xf32>
    %132 = tpu.concatenate %130, %131 in 1 : vector<8x32xf32>, vector<8x32xf32> -> vector<8x64xf32>
    %c0_55 = arith.constant 0 : index
    %c0_56 = arith.constant 0 : index
    %133 = vector.load %arg17[%c0_55, %c0_56] : memref<8x64xf32, #tpu.memory_space<vmem>>, vector<8x64xf32>
    tpu.vector_store %arg17[%c0_55, %c0_56], %132 {strides = array<i32>} : memref<8x64xf32, #tpu.memory_space<vmem>>, vector<8x64xf32>,
    return
  }
}

</mosaic_0001>

<llo_original>
// kernel: transformer_layer.1
$region0: #{transformer_layer.1}
  #allocation0 [shape = 'u32[]', space=smem, size = 0x4, offset = 0x4, fixed_abs, tag = 'smem constant byte address 0x4 - core index']
  #allocation1 [shape = 'u32[144,128]{1,0:T(1,128)}', space=vmem, size = 0x12000, scoped, tag = 'internal scratch']
  %s0 = inlined_call_operand.hbm [shape: f32[8,2,32], index: 0, kind: input, shape index: {}]
  %s1 = inlined_call_operand.vmem [shape: f32[32,32], index: 1, kind: input, shape index: {}]
  %s2 = inlined_call_operand.vmem [shape: f32[1,32], index: 2, kind: input, shape index: {}]
  %s3 = inlined_call_operand.vmem [shape: f32[32,32], index: 3, kind: input, shape index: {}]
  %s4 = inlined_call_operand.vmem [shape: f32[1,32], index: 4, kind: input, shape index: {}]
  %s5 = inlined_call_operand.vmem [shape: f32[32,32], index: 5, kind: input, shape index: {}]
  %s6 = inlined_call_operand.vmem [shape: f32[1,32], index: 6, kind: input, shape index: {}]
  %s7 = inlined_call_operand.hbm [shape: f32[32,32], index: 7, kind: input, shape index: {}]
  %s8 = inlined_call_operand.vmem [shape: f32[1,32], index: 8, kind: input, shape index: {}]
  %s9 = inlined_call_operand.vmem [shape: f32[1,32], index: 9, kind: input, shape index: {}]
  %s10 = inlined_call_operand.vmem [shape: f32[1,32], index: 10, kind: input, shape index: {}]
  %s11 = inlined_call_operand.hbm [shape: f32[32,64], index: 11, kind: input, shape index: {}]
  %s12 = inlined_call_operand.hbm [shape: f32[1,64], index: 12, kind: input, shape index: {}]
  %s13 = inlined_call_operand.vmem [shape: f32[64,32], index: 13, kind: input, shape index: {}]
  %s14 = inlined_call_operand.vmem [shape: f32[1,32], index: 14, kind: input, shape index: {}]
  %s15 = inlined_call_operand.vmem [shape: f32[1,32], index: 15, kind: input, shape index: {}]
  %s16 = inlined_call_operand.vmem [shape: f32[1,32], index: 16, kind: input, shape index: {}]
  %s17 = inlined_call_operand.vmem [shape: f32[8,64], index: 17, kind: output, shape index: {}]
  %s18 = sld [smem:[#allocation0]]
  $region94: #{transformer_layer.1} parent=0
    _
  %s20 = ssub.s32 1, %s18
  %s21 = scalar_select 0, %s20, %s18
  $region1: #{transformer_layer.1} parent=0
    #allocation2 [shape = 'u8[8192]{0}', space=vmem, size = 0x2000, scoped, tag = 'input window, operand 0, single buffered']
    #allocation3 [shape = 's32[1]{0}', space=sflag, size = 0x4, scoped, tag = 'scoped memory for transformer_layer.1']
    #allocation4 [shape = 'u8[16384]{0}', space=vmem, size = 0x4000, scoped, tag = 'input window, operand 7, single buffered']
    #allocation5 [shape = 's32[1]{0}', space=sflag, size = 0x4, scoped, tag = 'scoped memory for transformer_layer.1']
    #allocation6 [shape = 'u8[16384]{0}', space=vmem, size = 0x4000, scoped, tag = 'input window, operand 11, single buffered']
    #allocation7 [shape = 'u8[512]{0}', space=vmem, size = 0x400, scoped, tag = 'input window, operand 12, single buffered']
    #allocation8 [shape = 's32[1]{0}', space=sflag, size = 0x4, scoped, tag = 'scoped memory for transformer_layer.1']
    %22 = vsyncpa [#allocation3], 0
    %23 = vsyncpa [#allocation5], 0
    %24 = vsyncpa [#allocation8], 0
    // Predicated region
    $region2: #{transformer_layer.1} parent=1 // pred_check
      _
    $region3: #{transformer_layer.1} parent=1 // pred_check_branch
      %26 = sbr.rel (0) target = $region5
    $region4: #{transformer_layer.1} parent=1 // pred_region
      %s28 = ssub.s32 256, 256
      %29 = vsyncadd [#allocation3], %s28
      %s30 = sshll.u32 [#allocation2], 4
      %s31 = int_to_ptr.vmem [resolvable:$true] %s30
      %36 = dma.hbm_to_vmem [thread:$0]  %s0, 256, %s31, [#allocation3], 32, 32, 2
    $region5: #{transformer_layer.1} parent=1 // pred_fallthru
      _
    // Predicated region
    $region6: #{transformer_layer.1} parent=1 // pred_check
      _
    $region7: #{transformer_layer.1} parent=1 // pred_check_branch
      %38 = sbr.rel (0) target = $region9
    $region8: #{transformer_layer.1} parent=1 // pred_region
      _
    $region9: #{transformer_layer.1} parent=1 // pred_fallthru
      _
    // Predicated region
    $region10: #{transformer_layer.1} parent=1 // pred_check
      _
    $region11: #{transformer_layer.1} parent=1 // pred_check_branch
      %40 = sbr.rel (0) target = $region13
    $region12: #{transformer_layer.1} parent=1 // pred_region
      _
    $region13: #{transformer_layer.1} parent=1 // pred_fallthru
      _
    // Predicated region
    $region14: #{transformer_layer.1} parent=1 // pred_check
      _
    $region15: #{transformer_layer.1} parent=1 // pred_check_branch
      %42 = sbr.rel (0) target = $region17
    $region16: #{transformer_layer.1} parent=1 // pred_region
      _
    $region17: #{transformer_layer.1} parent=1 // pred_fallthru
      _
    // Predicated region
    $region18: #{transformer_layer.1} parent=1 // pred_check
      _
    $region19: #{transformer_layer.1} parent=1 // pred_check_branch
      %44 = sbr.rel (0) target = $region21
    $region20: #{transformer_layer.1} parent=1 // pred_region
      _
    $region21: #{transformer_layer.1} parent=1 // pred_fallthru
      _
    // Predicated region
    $region22: #{transformer_layer.1} parent=1 // pred_check
      _
    $region23: #{transformer_layer.1} parent=1 // pred_check_branch
      %46 = sbr.rel (0) target = $region25
    $region24: #{transformer_layer.1} parent=1 // pred_region
      _
    $region25: #{transformer_layer.1} parent=1 // pred_fallthru
      _
    // Predicated region
    $region26: #{transformer_layer.1} parent=1 // pred_check
      _
    $region27: #{transformer_layer.1} parent=1 // pred_check_branch
      %48 = sbr.rel (0) target = $region29
    $region28: #{transformer_layer.1} parent=1 // pred_region
      _
    $region29: #{transformer_layer.1} parent=1 // pred_fallthru
      _
    // Predicated region
    $region30: #{transformer_layer.1} parent=1 // pred_check
      _
    $region31: #{transformer_layer.1} parent=1 // pred_check_branch
      %50 = sbr.rel (0) target = $region33
    $region32: #{transformer_layer.1} parent=1 // pred_region
      %s52 = ssub.s32 512, 512
      %53 = vsyncadd [#allocation5], %s52
      %s54 = sshll.u32 [#allocation4], 4
      %s55 = int_to_ptr.vmem [resolvable:$true] %s54
      %60 = dma.hbm_to_vmem [thread:$0]  %s7, 512, %s55, [#allocation5], 128, 128, 8
    $region33: #{transformer_layer.1} parent=1 // pred_fallthru
      _
    // Predicated region
    $region34: #{transformer_layer.1} parent=1 // pred_check
      _
    $region35: #{transformer_layer.1} parent=1 // pred_check_branch
      %62 = sbr.rel (0) target = $region37
    $region36: #{transformer_layer.1} parent=1 // pred_region
      _
    $region37: #{transformer_layer.1} parent=1 // pred_fallthru
      _
    // Predicated region
    $region38: #{transformer_layer.1} parent=1 // pred_check
      _
    $region39: #{transformer_layer.1} parent=1 // pred_check_branch
      %64 = sbr.rel (0) target = $region41
    $region40: #{transformer_layer.1} parent=1 // pred_region
      _
    $region41: #{transformer_layer.1} parent=1 // pred_fallthru
      _
    // Predicated region
    $region42: #{transformer_layer.1} parent=1 // pred_check
      _
    $region43: #{transformer_layer.1} parent=1 // pred_check_branch
      %66 = sbr.rel (0) target = $region45
    $region44: #{transformer_layer.1} parent=1 // pred_region
      _
    $region45: #{transformer_layer.1} parent=1 // pred_fallthru
      _
    // Predicated region
    $region46: #{transformer_layer.1} parent=1 // pred_check
      _
    $region47: #{transformer_layer.1} parent=1 // pred_check_branch
      %68 = sbr.rel (0) target = $region49
    $region48: #{transformer_layer.1} parent=1 // pred_region
      %s70 = ssub.s32 512, 512
      %71 = vsyncadd [#allocation5], %s70
      %s72 = sshll.u32 [#allocation6], 4
      %s73 = int_to_ptr.vmem [resolvable:$true] %s72
      %78 = dma.hbm_to_vmem [thread:$0]  %s11, 512, %s73, [#allocation5], 128, 128, 8
    $region49: #{transformer_layer.1} parent=1 // pred_fallthru
      _
    // Predicated region
    $region50: #{transformer_layer.1} parent=1 // pred_check
      _
    $region51: #{transformer_layer.1} parent=1 // pred_check_branch
      %80 = sbr.rel (0) target = $region53
    $region52: #{transformer_layer.1} parent=1 // pred_region
      %s82 = ssub.s32 16, 16
      %83 = vsyncadd [#allocation8], %s82
      %s85 = sshll.u32 [#allocation7], 4
      %s86 = int_to_ptr.vmem [resolvable:$true] %s85
      %88 = dma.hbm_to_vmem [thread:$0]  %s12, 16, %s86, [#allocation8]
    $region53: #{transformer_layer.1} parent=1 // pred_fallthru
      _
    // Predicated region
    $region54: #{transformer_layer.1} parent=1 // pred_check
      _
    $region55: #{transformer_layer.1} parent=1 // pred_check_branch
      %90 = sbr.rel (0) target = $region57
    $region56: #{transformer_layer.1} parent=1 // pred_region
      _
    $region57: #{transformer_layer.1} parent=1 // pred_fallthru
      _
    // Predicated region
    $region58: #{transformer_layer.1} parent=1 // pred_check
      _
    $region59: #{transformer_layer.1} parent=1 // pred_check_branch
      %92 = sbr.rel (0) target = $region61
    $region60: #{transformer_layer.1} parent=1 // pred_region
      _
    $region61: #{transformer_layer.1} parent=1 // pred_fallthru
      _
    // Predicated region
    $region62: #{transformer_layer.1} parent=1 // pred_check
      _
    $region63: #{transformer_layer.1} parent=1 // pred_check_branch
      %94 = sbr.rel (0) target = $region65
    $region64: #{transformer_layer.1} parent=1 // pred_region
      _
    $region65: #{transformer_layer.1} parent=1 // pred_fallthru
      _
    // Predicated region
    $region66: #{transformer_layer.1} parent=1 // pred_check
      _
    $region67: #{transformer_layer.1} parent=1 // pred_check_branch
      %96 = sbr.rel (0) target = $region69
    $region68: #{transformer_layer.1} parent=1 // pred_region
      _
    $region69: #{transformer_layer.1} parent=1 // pred_fallthru
      _
    // Predicated region
    $region70: #{transformer_layer.1} parent=1 // pred_check
      _
    $region71: #{transformer_layer.1} parent=1 // pred_check_branch
      %98 = sbr.rel (0) target = $region73
    $region72: #{transformer_layer.1} parent=1 // pred_region
      %99 = dma.done [#allocation3], 256
    $region73: #{transformer_layer.1} parent=1 // pred_fallthru
      _
    // Predicated region
    $region74: #{transformer_layer.1} parent=1 // pred_check
      _
    $region75: #{transformer_layer.1} parent=1 // pred_check_branch
      %101 = sbr.rel (0) target = $region77
    $region76: #{transformer_layer.1} parent=1 // pred_region
      %102 = dma.done [#allocation5], 512
    $region77: #{transformer_layer.1} parent=1 // pred_fallthru
      _
    // Predicated region
    $region78: #{transformer_layer.1} parent=1 // pred_check
      _
    $region79: #{transformer_layer.1} parent=1 // pred_check_branch
      %104 = sbr.rel (0) target = $region81
    $region80: #{transformer_layer.1} parent=1 // pred_region
      %105 = dma.done [#allocation5], 512
    $region81: #{transformer_layer.1} parent=1 // pred_fallthru
      _
    // Predicated region
    $region82: #{transformer_layer.1} parent=1 // pred_check
      _
    $region83: #{transformer_layer.1} parent=1 // pred_check_branch
      %107 = sbr.rel (0) target = $region85
    $region84: #{transformer_layer.1} parent=1 // pred_region
      %108 = dma.done [#allocation8], 16
    $region85: #{transformer_layer.1} parent=1 // pred_fallthru
      _
    %v109 = vld [vmem:[#allocation2] sm:$0x3]
    %v110 = vld [vmem:[#allocation2 + $0x2] sm:$0x3]
    %v111 = vld [vmem:[#allocation2 + $0x4] sm:$0x3]
    %v112 = vld [vmem:[#allocation2 + $0x6] sm:$0x3]
    %v113 = vld [vmem:[#allocation2 + $0x8] sm:$0x3]
    %v114 = vld [vmem:[#allocation2 + $0xa] sm:$0x3]
    %v115 = vld [vmem:[#allocation2 + $0xc] sm:$0x3]
    %v116 = vld [vmem:[#allocation2 + $0xe] sm:$0x3]
    %v125 = vrot.slane %v110, 7
    %vm126 = vcmask 1041409
    %v127 = vsel %vm126, %v125, %v109
    %v128 = vrot.slane %v111, 6
    %vm129 = vcmask 1042434
    %v130 = vsel %vm129, %v128, %v127
    %v131 = vrot.slane %v112, 5
    %vm132 = vcmask 1043459
    %v133 = vsel %vm132, %v131, %v130
    %v134 = vrot.slane %v113, 4
    %vm135 = vcmask 1044484
    %v136 = vsel %vm135, %v134, %v133
    %v137 = vrot.slane %v114, 3
    %vm138 = vcmask 1045509
    %v139 = vsel %vm138, %v137, %v136
    %v140 = vrot.slane %v115, 2
    %vm141 = vcmask 1046534
    %v142 = vsel %vm141, %v140, %v139
    %v143 = vrot.slane %v116, 1
    %vm144 = vcmask 1047559
    %v145 = vsel %vm144, %v143, %v142
    %v147 = vrot.slane %v109, 1
    %v148 = vsel %vm126, %v110, %v147
    %v149 = vrot.slane %v111, 7
    %v150 = vsel %vm129, %v149, %v148
    %v151 = vrot.slane %v112, 6
    %v152 = vsel %vm132, %v151, %v150
    %v153 = vrot.slane %v113, 5
    %v154 = vsel %vm135, %v153, %v152
    %v155 = vrot.slane %v114, 4
    %v156 = vsel %vm138, %v155, %v154
    %v157 = vrot.slane %v115, 3
    %v158 = vsel %vm141, %v157, %v156
    %v159 = vrot.slane %v116, 2
    %v160 = vsel %vm144, %v159, %v158
    %v162 = vld [vmem:[%s1] sm:$0xff]
    %v163 = vld [vmem:[%s1 + $0x8] sm:$0xff]
    %v164 = vld [vmem:[%s1 + $0x10] sm:$0xff]
    %v165 = vld [vmem:[%s1 + $0x18] sm:$0xff]
    %v166 = vld [vmem:[%s2] sm:$0x1]
    %v168 = vlaneseq
    %v169 = vshrl.u32 %v168, 7
    %v170 = vsub.s32 0, %v169
    %v171 = vrot.slane %v166, %v170
    %vm173 = vcmask 261120
    %v174 = vsel %vm173, %v145, 0
    %v176 = vsel %vm173, %v160, 0
    %178 = vmatprep.subr.mxu0 0.0
    %179 = vmatpush1.msra.mxu0 %v162
    %180 = vmatprep.subr.mxu0 0.0
    %181 = vmatpush1.msra.mxu0 %v163
    %182 = vmatprep.subr.mxu0 0.0
    %183 = vmatpush1.msra.mxu0 %v164
    %184 = vmatprep.subr.mxu0 0.0
    %185 = vmatpush1.msra.mxu0 %v165
    %186 = vmatprep.subr.mxu0 0.0
    %187 = vmatpush1.msra.mxu0 0.0
    %188 = vmatprep.subr.mxu0 0.0
    %189 = vmatpush1.msra.mxu0 0.0
    %190 = vmatprep.subr.mxu0 0.0
    %191 = vmatpush1.msra.mxu0 0.0
    %192 = vmatprep.subr.mxu0 0.0
    %193 = vmatpush1.msra.mxu0 0.0
    %194 = vmatprep.subr.mxu0 0.0
    %195 = vmatpush1.msra.mxu0 0.0
    %196 = vmatprep.subr.mxu0 0.0
    %197 = vmatpush1.msra.mxu0 0.0
    %198 = vmatprep.subr.mxu0 0.0
    %199 = vmatpush1.msra.mxu0 0.0
    %200 = vmatprep.subr.mxu0 0.0
    %201 = vmatpush1.msra.mxu0 0.0
    %202 = vmatprep.subr.mxu0 0.0
    %203 = vmatpush1.msra.mxu0 0.0
    %204 = vmatprep.subr.mxu0 0.0
    %205 = vmatpush1.msra.mxu0 0.0
    %206 = vmatprep.subr.mxu0 0.0
    %207 = vmatpush1.msra.mxu0 0.0
    %208 = vmatprep.subr.mxu0 0.0
    %209 = vmatpush1.msra.mxu0 0.0
    %210 = vmatprep.subr.mxu0 0.0
    %211 = vmatpush1.msra.mxu0 0.0
    %212 = vmatprep.subr.mxu0 0.0
    %213 = vmatpush1.msra.mxu0 0.0
    %214 = vmatprep.subr.mxu0 0.0
    %215 = vmatpush1.msra.mxu0 0.0
    %216 = vmatprep.subr.mxu0 0.0
    %217 = vmatpush1.msra.mxu0 0.0
    %218 = vmatprep.subr.mxu0 0.0
    %219 = vmatpush1.msra.mxu0 0.0
    %220 = vmatprep.subr.mxu0 0.0
    %221 = vmatpush1.msra.mxu0 0.0
    %222 = vmatprep.subr.mxu0 0.0
    %223 = vmatpush1.msra.mxu0 0.0
    %224 = vmatprep.subr.mxu0 0.0
    %225 = vmatpush1.msra.mxu0 0.0
    %226 = vmatprep.subr.mxu0 0.0
    %227 = vmatpush1.msra.mxu0 0.0
    %228 = vmatprep.subr.mxu0 0.0
    %229 = vmatpush1.msra.mxu0 0.0
    %230 = vmatprep.subr.mxu0 0.0
    %231 = vmatpush1.msra.mxu0 0.0
    %232 = vmatprep.subr.mxu0 0.0
    %233 = vmatpush1.msra.mxu0 0.0
    %234 = vmatprep.subr.mxu0 0.0
    %235 = vmatpush1.msra.mxu0 0.0
    %236 = vmatprep.subr.mxu0 0.0
    %237 = vmatpush1.msra.mxu0 0.0
    %238 = vmatprep.subr.mxu0 0.0
    %239 = vmatpush1.msra.mxu0 0.0
    %240 = vmatprep.subr.mxu0 0.0
    %241 = vmatpush1.msra.mxu0 0.0
    %242 = vmatprep.mubr.f32.mxu0 0.0
    %243 = vmatmul.mubr.f32.gmra.mrb[0].mxu0 %v174
    %v244 = vpop.f32.mrb[0].mxu0
    %v245 = vadd.f32 %v171, %v244
    %v246 = vpop.f32.mrb[0].mxu0
    %247 = vmatprep.mubr.f32.mxu0 0.0
    %248 = vmatmul.mubr.f32.gmra.mrb[0].mxu0 %v176
    %v249 = vpop.f32.mrb[0].mxu0
    %v250 = vadd.f32 %v171, %v249
    %v251 = vpop.f32.mrb[0].mxu0
    %252 = vdwg.mxu0
    %v253 = vmul.f32 %v245, 0.35355338
    %v254 = vmul.f32 %v250, 0.35355338
    %v255 = vld [vmem:[%s3] sm:$0xff]
    %v256 = vld [vmem:[%s3 + $0x8] sm:$0xff]
    %v257 = vld [vmem:[%s3 + $0x10] sm:$0xff]
    %v258 = vld [vmem:[%s3 + $0x18] sm:$0xff]
    %v259 = vld [vmem:[%s4] sm:$0x1]
    %v261 = vlaneseq
    %v262 = vshrl.u32 %v261, 7
    %v263 = vsub.s32 0, %v262
    %v264 = vrot.slane %v259, %v263
    %266 = vmatprep.subr.mxu0 0.0
    %267 = vmatpush1.msra.mxu0 %v255
    %268 = vmatprep.subr.mxu0 0.0
    %269 = vmatpush1.msra.mxu0 %v256
    %270 = vmatprep.subr.mxu0 0.0
    %271 = vmatpush1.msra.mxu0 %v257
    %272 = vmatprep.subr.mxu0 0.0
    %273 = vmatpush1.msra.mxu0 %v258
    %274 = vmatprep.subr.mxu0 0.0
    %275 = vmatpush1.msra.mxu0 0.0
    %276 = vmatprep.subr.mxu0 0.0
    %277 = vmatpush1.msra.mxu0 0.0
    %278 = vmatprep.subr.mxu0 0.0
    %279 = vmatpush1.msra.mxu0 0.0
    %280 = vmatprep.subr.mxu0 0.0
    %281 = vmatpush1.msra.mxu0 0.0
    %282 = vmatprep.subr.mxu0 0.0
    %283 = vmatpush1.msra.mxu0 0.0
    %284 = vmatprep.subr.mxu0 0.0
    %285 = vmatpush1.msra.mxu0 0.0
    %286 = vmatprep.subr.mxu0 0.0
    %287 = vmatpush1.msra.mxu0 0.0
    %288 = vmatprep.subr.mxu0 0.0
    %289 = vmatpush1.msra.mxu0 0.0
    %290 = vmatprep.subr.mxu0 0.0
    %291 = vmatpush1.msra.mxu0 0.0
    %292 = vmatprep.subr.mxu0 0.0
    %293 = vmatpush1.msra.mxu0 0.0
    %294 = vmatprep.subr.mxu0 0.0
    %295 = vmatpush1.msra.mxu0 0.0
    %296 = vmatprep.subr.mxu0 0.0
    %297 = vmatpush1.msra.mxu0 0.0
    %298 = vmatprep.subr.mxu0 0.0
    %299 = vmatpush1.msra.mxu0 0.0
    %300 = vmatprep.subr.mxu0 0.0
    %301 = vmatpush1.msra.mxu0 0.0
    %302 = vmatprep.subr.mxu0 0.0
    %303 = vmatpush1.msra.mxu0 0.0
    %304 = vmatprep.subr.mxu0 0.0
    %305 = vmatpush1.msra.mxu0 0.0
    %306 = vmatprep.subr.mxu0 0.0
    %307 = vmatpush1.msra.mxu0 0.0
    %308 = vmatprep.subr.mxu0 0.0
    %309 = vmatpush1.msra.mxu0 0.0
    %310 = vmatprep.subr.mxu0 0.0
    %311 = vmatpush1.msra.mxu0 0.0
    %312 = vmatprep.subr.mxu0 0.0
    %313 = vmatpush1.msra.mxu0 0.0
    %314 = vmatprep.subr.mxu0 0.0
    %315 = vmatpush1.msra.mxu0 0.0
    %316 = vmatprep.subr.mxu0 0.0
    %317 = vmatpush1.msra.mxu0 0.0
    %318 = vmatprep.subr.mxu0 0.0
    %319 = vmatpush1.msra.mxu0 0.0
    %320 = vmatprep.subr.mxu0 0.0
    %321 = vmatpush1.msra.mxu0 0.0
    %322 = vmatprep.subr.mxu0 0.0
    %323 = vmatpush1.msra.mxu0 0.0
    %324 = vmatprep.subr.mxu0 0.0
    %325 = vmatpush1.msra.mxu0 0.0
    %326 = vmatprep.subr.mxu0 0.0
    %327 = vmatpush1.msra.mxu0 0.0
    %328 = vmatprep.subr.mxu0 0.0
    %329 = vmatpush1.msra.mxu0 0.0
    %330 = vmatprep.mubr.f32.mxu0 0.0
    %331 = vmatmul.mubr.f32.gmra.mrb[0].mxu0 %v174
    %v332 = vpop.f32.mrb[0].mxu0
    %v333 = vadd.f32 %v264, %v332
    %v334 = vpop.f32.mrb[0].mxu0
    %335 = vmatprep.mubr.f32.mxu0 0.0
    %336 = vmatmul.mubr.f32.gmra.mrb[0].mxu0 %v176
    %v337 = vpop.f32.mrb[0].mxu0
    %v338 = vadd.f32 %v264, %v337
    %v339 = vpop.f32.mrb[0].mxu0
    %340 = vdwg.mxu0
    %v341 = vld [vmem:[%s5] sm:$0xff]
    %v342 = vld [vmem:[%s5 + $0x8] sm:$0xff]
    %v343 = vld [vmem:[%s5 + $0x10] sm:$0xff]
    %v344 = vld [vmem:[%s5 + $0x18] sm:$0xff]
    %v345 = vld [vmem:[%s6] sm:$0x1]
    %v347 = vlaneseq
    %v348 = vshrl.u32 %v347, 7
    %v349 = vsub.s32 0, %v348
    %v350 = vrot.slane %v345, %v349
    %352 = vmatprep.subr.mxu0 0.0
    %353 = vmatpush1.msra.mxu0 %v341
    %354 = vmatprep.subr.mxu0 0.0
    %355 = vmatpush1.msra.mxu0 %v342
    %356 = vmatprep.subr.mxu0 0.0
    %357 = vmatpush1.msra.mxu0 %v343
    %358 = vmatprep.subr.mxu0 0.0
    %359 = vmatpush1.msra.mxu0 %v344
    %360 = vmatprep.subr.mxu0 0.0
    %361 = vmatpush1.msra.mxu0 0.0
    %362 = vmatprep.subr.mxu0 0.0
    %363 = vmatpush1.msra.mxu0 0.0
    %364 = vmatprep.subr.mxu0 0.0
    %365 = vmatpush1.msra.mxu0 0.0
    %366 = vmatprep.subr.mxu0 0.0
    %367 = vmatpush1.msra.mxu0 0.0
    %368 = vmatprep.subr.mxu0 0.0
    %369 = vmatpush1.msra.mxu0 0.0
    %370 = vmatprep.subr.mxu0 0.0
    %371 = vmatpush1.msra.mxu0 0.0
    %372 = vmatprep.subr.mxu0 0.0
    %373 = vmatpush1.msra.mxu0 0.0
    %374 = vmatprep.subr.mxu0 0.0
    %375 = vmatpush1.msra.mxu0 0.0
    %376 = vmatprep.subr.mxu0 0.0
    %377 = vmatpush1.msra.mxu0 0.0
    %378 = vmatprep.subr.mxu0 0.0
    %379 = vmatpush1.msra.mxu0 0.0
    %380 = vmatprep.subr.mxu0 0.0
    %381 = vmatpush1.msra.mxu0 0.0
    %382 = vmatprep.subr.mxu0 0.0
    %383 = vmatpush1.msra.mxu0 0.0
    %384 = vmatprep.subr.mxu0 0.0
    %385 = vmatpush1.msra.mxu0 0.0
    %386 = vmatprep.subr.mxu0 0.0
    %387 = vmatpush1.msra.mxu0 0.0
    %388 = vmatprep.subr.mxu0 0.0
    %389 = vmatpush1.msra.mxu0 0.0
    %390 = vmatprep.subr.mxu0 0.0
    %391 = vmatpush1.msra.mxu0 0.0
    %392 = vmatprep.subr.mxu0 0.0
    %393 = vmatpush1.msra.mxu0 0.0
    %394 = vmatprep.subr.mxu0 0.0
    %395 = vmatpush1.msra.mxu0 0.0
    %396 = vmatprep.subr.mxu0 0.0
    %397 = vmatpush1.msra.mxu0 0.0
    %398 = vmatprep.subr.mxu0 0.0
    %399 = vmatpush1.msra.mxu0 0.0
    %400 = vmatprep.subr.mxu0 0.0
    %401 = vmatpush1.msra.mxu0 0.0
    %402 = vmatprep.subr.mxu0 0.0
    %403 = vmatpush1.msra.mxu0 0.0
    %404 = vmatprep.subr.mxu0 0.0
    %405 = vmatpush1.msra.mxu0 0.0
    %406 = vmatprep.subr.mxu0 0.0
    %407 = vmatpush1.msra.mxu0 0.0
    %408 = vmatprep.subr.mxu0 0.0
    %409 = vmatpush1.msra.mxu0 0.0
    %410 = vmatprep.subr.mxu0 0.0
    %411 = vmatpush1.msra.mxu0 0.0
    %412 = vmatprep.subr.mxu0 0.0
    %413 = vmatpush1.msra.mxu0 0.0
    %414 = vmatprep.subr.mxu0 0.0
    %415 = vmatpush1.msra.mxu0 0.0
    %416 = vmatprep.mubr.f32.mxu0 0.0
    %417 = vmatmul.mubr.f32.gmra.mrb[0].mxu0 %v174
    %v418 = vpop.f32.mrb[0].mxu0
    %v419 = vadd.f32 %v350, %v418
    %v420 = vpop.f32.mrb[0].mxu0
    %421 = vmatprep.mubr.f32.mxu0 0.0
    %422 = vmatmul.mubr.f32.gmra.mrb[0].mxu0 %v176
    %v423 = vpop.f32.mrb[0].mxu0
    %v424 = vadd.f32 %v350, %v423
    %v425 = vpop.f32.mrb[0].mxu0
    %426 = vdwg.mxu0
    %429 = vrot.lane.b32.xlu0 %v253, 120
    %v430 = vpop.permute.xlu0 %429
    %431 = vrot.lane.b32.xlu0 %v254, 120
    %v432 = vpop.permute.xlu0 %431
    %433 = vrot.lane.b32.xlu0 %v253, 112
    %v434 = vpop.permute.xlu0 %433
    %435 = vrot.lane.b32.xlu0 %v254, 112
    %v436 = vpop.permute.xlu0 %435
    %437 = vrot.lane.b32.xlu0 %v253, 104
    %v438 = vpop.permute.xlu0 %437
    %439 = vrot.lane.b32.xlu0 %v254, 104
    %v440 = vpop.permute.xlu0 %439
    %443 = vrot.lane.b32.xlu0 %v333, 120
    %v444 = vpop.permute.xlu0 %443
    %445 = vrot.lane.b32.xlu0 %v338, 120
    %v446 = vpop.permute.xlu0 %445
    %447 = vrot.lane.b32.xlu0 %v333, 112
    %v448 = vpop.permute.xlu0 %447
    %449 = vrot.lane.b32.xlu0 %v338, 112
    %v450 = vpop.permute.xlu0 %449
    %451 = vrot.lane.b32.xlu0 %v333, 104
    %v452 = vpop.permute.xlu0 %451
    %453 = vrot.lane.b32.xlu0 %v338, 104
    %v454 = vpop.permute.xlu0 %453
    %457 = vrot.lane.b32.xlu0 %v419, 120
    %v458 = vpop.permute.xlu0 %457
    %459 = vrot.lane.b32.xlu0 %v424, 120
    %v460 = vpop.permute.xlu0 %459
    %463 = vrot.lane.b32.xlu0 %v419, 112
    %v464 = vpop.permute.xlu0 %463
    %465 = vrot.lane.b32.xlu0 %v424, 112
    %v466 = vpop.permute.xlu0 %465
    %469 = vrot.lane.b32.xlu0 %v419, 104
    %v470 = vpop.permute.xlu0 %469
    %471 = vrot.lane.b32.xlu0 %v424, 104
    %v472 = vpop.permute.xlu0 %471
    %vm475 = vcmask 64512
    %v476 = vsel %vm475, %v253, 0
    %v478 = vsel %vm475, %v333, 0
    %480 = vmatprep.subr.mxu0 0.0
    %481 = vmatpush1.xpose.msra.mxu0 %v478
    %482 = vmatprep.subr.mxu0 0.0
    %483 = vmatpush1.xpose.msra.mxu0 0.0
    %484 = vmatprep.subr.mxu0 0.0
    %485 = vmatpush1.xpose.msra.mxu0 0.0
    %486 = vmatprep.subr.mxu0 0.0
    %487 = vmatpush1.xpose.msra.mxu0 0.0
    %488 = vmatprep.subr.mxu0 0.0
    %489 = vmatpush1.xpose.msra.mxu0 0.0
    %490 = vmatprep.subr.mxu0 0.0
    %491 = vmatpush1.xpose.msra.mxu0 0.0
    %492 = vmatprep.subr.mxu0 0.0
    %493 = vmatpush1.xpose.msra.mxu0 0.0
    %494 = vmatprep.subr.mxu0 0.0
    %495 = vmatpush1.xpose.msra.mxu0 0.0
    %496 = vmatprep.subr.mxu0 0.0
    %497 = vmatpush1.xpose.msra.mxu0 0.0
    %498 = vmatprep.subr.mxu0 0.0
    %499 = vmatpush1.xpose.msra.mxu0 0.0
    %500 = vmatprep.subr.mxu0 0.0
    %501 = vmatpush1.xpose.msra.mxu0 0.0
    %502 = vmatprep.subr.mxu0 0.0
    %503 = vmatpush1.xpose.msra.mxu0 0.0
    %504 = vmatprep.subr.mxu0 0.0
    %505 = vmatpush1.xpose.msra.mxu0 0.0
    %506 = vmatprep.subr.mxu0 0.0
    %507 = vmatpush1.xpose.msra.mxu0 0.0
    %508 = vmatprep.subr.mxu0 0.0
    %509 = vmatpush1.xpose.msra.mxu0 0.0
    %510 = vmatprep.subr.mxu0 0.0
    %511 = vmatpush1.xpose.msra.mxu0 0.0
    %512 = vmatprep.subr.mxu0 0.0
    %513 = vmatpush1.xpose.msra.mxu0 0.0
    %514 = vmatprep.subr.mxu0 0.0
    %515 = vmatpush1.xpose.msra.mxu0 0.0
    %516 = vmatprep.subr.mxu0 0.0
    %517 = vmatpush1.xpose.msra.mxu0 0.0
    %518 = vmatprep.subr.mxu0 0.0
    %519 = vmatpush1.xpose.msra.mxu0 0.0
    %520 = vmatprep.subr.mxu0 0.0
    %521 = vmatpush1.xpose.msra.mxu0 0.0
    %522 = vmatprep.subr.mxu0 0.0
    %523 = vmatpush1.xpose.msra.mxu0 0.0
    %524 = vmatprep.subr.mxu0 0.0
    %525 = vmatpush1.xpose.msra.mxu0 0.0
    %526 = vmatprep.subr.mxu0 0.0
    %527 = vmatpush1.xpose.msra.mxu0 0.0
    %528 = vmatprep.subr.mxu0 0.0
    %529 = vmatpush1.xpose.msra.mxu0 0.0
    %530 = vmatprep.subr.mxu0 0.0
    %531 = vmatpush1.xpose.msra.mxu0 0.0
    %532 = vmatprep.subr.mxu0 0.0
    %533 = vmatpush1.xpose.msra.mxu0 0.0
    %534 = vmatprep.subr.mxu0 0.0
    %535 = vmatpush1.xpose.msra.mxu0 0.0
    %536 = vmatprep.subr.mxu0 0.0
    %537 = vmatpush1.xpose.msra.mxu0 0.0
    %538 = vmatprep.subr.mxu0 0.0
    %539 = vmatpush1.xpose.msra.mxu0 0.0
    %540 = vmatprep.subr.mxu0 0.0
    %541 = vmatpush1.xpose.msra.mxu0 0.0
    %542 = vmatprep.subr.mxu0 0.0
    %543 = vmatpush1.xpose.msra.mxu0 0.0
    %544 = vmatprep.mubr.f32.mxu0 0.0
    %545 = vmatmul.mubr.f32.gmra.mrb[0].mxu0 %v476
    %v546 = vpop.f32.mrb[0].mxu0
    %v547 = vadd.f32 0.0, %v546
    %v548 = vpop.f32.mrb[0].mxu0
    %549 = vdwg.mxu0
    %v550 = vsel %vm475, %v254, 0
    %v552 = vsel %vm475, %v338, 0
    %554 = vmatprep.subr.mxu0 0.0
    %555 = vmatpush1.xpose.msra.mxu0 %v552
    %556 = vmatprep.subr.mxu0 0.0
    %557 = vmatpush1.xpose.msra.mxu0 0.0
    %558 = vmatprep.subr.mxu0 0.0
    %559 = vmatpush1.xpose.msra.mxu0 0.0
    %560 = vmatprep.subr.mxu0 0.0
    %561 = vmatpush1.xpose.msra.mxu0 0.0
    %562 = vmatprep.subr.mxu0 0.0
    %563 = vmatpush1.xpose.msra.mxu0 0.0
    %564 = vmatprep.subr.mxu0 0.0
    %565 = vmatpush1.xpose.msra.mxu0 0.0
    %566 = vmatprep.subr.mxu0 0.0
    %567 = vmatpush1.xpose.msra.mxu0 0.0
    %568 = vmatprep.subr.mxu0 0.0
    %569 = vmatpush1.xpose.msra.mxu0 0.0
    %570 = vmatprep.subr.mxu0 0.0
    %571 = vmatpush1.xpose.msra.mxu0 0.0
    %572 = vmatprep.subr.mxu0 0.0
    %573 = vmatpush1.xpose.msra.mxu0 0.0
    %574 = vmatprep.subr.mxu0 0.0
    %575 = vmatpush1.xpose.msra.mxu0 0.0
    %576 = vmatprep.subr.mxu0 0.0
    %577 = vmatpush1.xpose.msra.mxu0 0.0
    %578 = vmatprep.subr.mxu0 0.0
    %579 = vmatpush1.xpose.msra.mxu0 0.0
    %580 = vmatprep.subr.mxu0 0.0
    %581 = vmatpush1.xpose.msra.mxu0 0.0
    %582 = vmatprep.subr.mxu0 0.0
    %583 = vmatpush1.xpose.msra.mxu0 0.0
    %584 = vmatprep.subr.mxu0 0.0
    %585 = vmatpush1.xpose.msra.mxu0 0.0
    %586 = vmatprep.subr.mxu0 0.0
    %587 = vmatpush1.xpose.msra.mxu0 0.0
    %588 = vmatprep.subr.mxu0 0.0
    %589 = vmatpush1.xpose.msra.mxu0 0.0
    %590 = vmatprep.subr.mxu0 0.0
    %591 = vmatpush1.xpose.msra.mxu0 0.0
    %592 = vmatprep.subr.mxu0 0.0
    %593 = vmatpush1.xpose.msra.mxu0 0.0
    %594 = vmatprep.subr.mxu0 0.0
    %595 = vmatpush1.xpose.msra.mxu0 0.0
    %596 = vmatprep.subr.mxu0 0.0
    %597 = vmatpush1.xpose.msra.mxu0 0.0
    %598 = vmatprep.subr.mxu0 0.0
    %599 = vmatpush1.xpose.msra.mxu0 0.0
    %600 = vmatprep.subr.mxu0 0.0
    %601 = vmatpush1.xpose.msra.mxu0 0.0
    %602 = vmatprep.subr.mxu0 0.0
    %603 = vmatpush1.xpose.msra.mxu0 0.0
    %604 = vmatprep.subr.mxu0 0.0
    %605 = vmatpush1.xpose.msra.mxu0 0.0
    %606 = vmatprep.subr.mxu0 0.0
    %607 = vmatpush1.xpose.msra.mxu0 0.0
    %608 = vmatprep.subr.mxu0 0.0
    %609 = vmatpush1.xpose.msra.mxu0 0.0
    %610 = vmatprep.subr.mxu0 0.0
    %611 = vmatpush1.xpose.msra.mxu0 0.0
    %612 = vmatprep.subr.mxu0 0.0
    %613 = vmatpush1.xpose.msra.mxu0 0.0
    %614 = vmatprep.subr.mxu0 0.0
    %615 = vmatpush1.xpose.msra.mxu0 0.0
    %616 = vmatprep.subr.mxu0 0.0
    %617 = vmatpush1.xpose.msra.mxu0 0.0
    %618 = vmatprep.mubr.f32.mxu0 0.0
    %619 = vmatmul.mubr.f32.gmra.mrb[0].mxu0 %v550
    %v620 = vpop.f32.mrb[0].mxu0
    %v621 = vadd.f32 0.0, %v620
    %v622 = vpop.f32.mrb[0].mxu0
    %623 = vdwg.mxu0
    %v624 = vsel %vm475, %v430, 0
    %v626 = vsel %vm475, %v444, 0
    %628 = vmatprep.subr.mxu0 0.0
    %629 = vmatpush1.xpose.msra.mxu0 %v626
    %630 = vmatprep.subr.mxu0 0.0
    %631 = vmatpush1.xpose.msra.mxu0 0.0
    %632 = vmatprep.subr.mxu0 0.0
    %633 = vmatpush1.xpose.msra.mxu0 0.0
    %634 = vmatprep.subr.mxu0 0.0
    %635 = vmatpush1.xpose.msra.mxu0 0.0
    %636 = vmatprep.subr.mxu0 0.0
    %637 = vmatpush1.xpose.msra.mxu0 0.0
    %638 = vmatprep.subr.mxu0 0.0
    %639 = vmatpush1.xpose.msra.mxu0 0.0
    %640 = vmatprep.subr.mxu0 0.0
    %641 = vmatpush1.xpose.msra.mxu0 0.0
    %642 = vmatprep.subr.mxu0 0.0
    %643 = vmatpush1.xpose.msra.mxu0 0.0
    %644 = vmatprep.subr.mxu0 0.0
    %645 = vmatpush1.xpose.msra.mxu0 0.0
    %646 = vmatprep.subr.mxu0 0.0
    %647 = vmatpush1.xpose.msra.mxu0 0.0
    %648 = vmatprep.subr.mxu0 0.0
    %649 = vmatpush1.xpose.msra.mxu0 0.0
    %650 = vmatprep.subr.mxu0 0.0
    %651 = vmatpush1.xpose.msra.mxu0 0.0
    %652 = vmatprep.subr.mxu0 0.0
    %653 = vmatpush1.xpose.msra.mxu0 0.0
    %654 = vmatprep.subr.mxu0 0.0
    %655 = vmatpush1.xpose.msra.mxu0 0.0
    %656 = vmatprep.subr.mxu0 0.0
    %657 = vmatpush1.xpose.msra.mxu0 0.0
    %658 = vmatprep.subr.mxu0 0.0
    %659 = vmatpush1.xpose.msra.mxu0 0.0
    %660 = vmatprep.subr.mxu0 0.0
    %661 = vmatpush1.xpose.msra.mxu0 0.0
    %662 = vmatprep.subr.mxu0 0.0
    %663 = vmatpush1.xpose.msra.mxu0 0.0
    %664 = vmatprep.subr.mxu0 0.0
    %665 = vmatpush1.xpose.msra.mxu0 0.0
    %666 = vmatprep.subr.mxu0 0.0
    %667 = vmatpush1.xpose.msra.mxu0 0.0
    %668 = vmatprep.subr.mxu0 0.0
    %669 = vmatpush1.xpose.msra.mxu0 0.0
    %670 = vmatprep.subr.mxu0 0.0
    %671 = vmatpush1.xpose.msra.mxu0 0.0
    %672 = vmatprep.subr.mxu0 0.0
    %673 = vmatpush1.xpose.msra.mxu0 0.0
    %674 = vmatprep.subr.mxu0 0.0
    %675 = vmatpush1.xpose.msra.mxu0 0.0
    %676 = vmatprep.subr.mxu0 0.0
    %677 = vmatpush1.xpose.msra.mxu0 0.0
    %678 = vmatprep.subr.mxu0 0.0
    %679 = vmatpush1.xpose.msra.mxu0 0.0
    %680 = vmatprep.subr.mxu0 0.0
    %681 = vmatpush1.xpose.msra.mxu0 0.0
    %682 = vmatprep.subr.mxu0 0.0
    %683 = vmatpush1.xpose.msra.mxu0 0.0
    %684 = vmatprep.subr.mxu0 0.0
    %685 = vmatpush1.xpose.msra.mxu0 0.0
    %686 = vmatprep.subr.mxu0 0.0
    %687 = vmatpush1.xpose.msra.mxu0 0.0
    %688 = vmatprep.subr.mxu0 0.0
    %689 = vmatpush1.xpose.msra.mxu0 0.0
    %690 = vmatprep.subr.mxu0 0.0
    %691 = vmatpush1.xpose.msra.mxu0 0.0
    %692 = vmatprep.mubr.f32.mxu0 0.0
    %693 = vmatmul.mubr.f32.gmra.mrb[0].mxu0 %v624
    %v694 = vpop.f32.mrb[0].mxu0
    %v695 = vadd.f32 0.0, %v694
    %v696 = vpop.f32.mrb[0].mxu0
    %697 = vdwg.mxu0
    %v698 = vsel %vm475, %v432, 0
    %v700 = vsel %vm475, %v446, 0
    %702 = vmatprep.subr.mxu0 0.0
    %703 = vmatpush1.xpose.msra.mxu0 %v700
    %704 = vmatprep.subr.mxu0 0.0
    %705 = vmatpush1.xpose.msra.mxu0 0.0
    %706 = vmatprep.subr.mxu0 0.0
    %707 = vmatpush1.xpose.msra.mxu0 0.0
    %708 = vmatprep.subr.mxu0 0.0
    %709 = vmatpush1.xpose.msra.mxu0 0.0
    %710 = vmatprep.subr.mxu0 0.0
    %711 = vmatpush1.xpose.msra.mxu0 0.0
    %712 = vmatprep.subr.mxu0 0.0
    %713 = vmatpush1.xpose.msra.mxu0 0.0
    %714 = vmatprep.subr.mxu0 0.0
    %715 = vmatpush1.xpose.msra.mxu0 0.0
    %716 = vmatprep.subr.mxu0 0.0
    %717 = vmatpush1.xpose.msra.mxu0 0.0
    %718 = vmatprep.subr.mxu0 0.0
    %719 = vmatpush1.xpose.msra.mxu0 0.0
    %720 = vmatprep.subr.mxu0 0.0
    %721 = vmatpush1.xpose.msra.mxu0 0.0
    %722 = vmatprep.subr.mxu0 0.0
    %723 = vmatpush1.xpose.msra.mxu0 0.0
    %724 = vmatprep.subr.mxu0 0.0
    %725 = vmatpush1.xpose.msra.mxu0 0.0
    %726 = vmatprep.subr.mxu0 0.0
    %727 = vmatpush1.xpose.msra.mxu0 0.0
    %728 = vmatprep.subr.mxu0 0.0
    %729 = vmatpush1.xpose.msra.mxu0 0.0
    %730 = vmatprep.subr.mxu0 0.0
    %731 = vmatpush1.xpose.msra.mxu0 0.0
    %732 = vmatprep.subr.mxu0 0.0
    %733 = vmatpush1.xpose.msra.mxu0 0.0
    %734 = vmatprep.subr.mxu0 0.0
    %735 = vmatpush1.xpose.msra.mxu0 0.0
    %736 = vmatprep.subr.mxu0 0.0
    %737 = vmatpush1.xpose.msra.mxu0 0.0
    %738 = vmatprep.subr.mxu0 0.0
    %739 = vmatpush1.xpose.msra.mxu0 0.0
    %740 = vmatprep.subr.mxu0 0.0
    %741 = vmatpush1.xpose.msra.mxu0 0.0
    %742 = vmatprep.subr.mxu0 0.0
    %743 = vmatpush1.xpose.msra.mxu0 0.0
    %744 = vmatprep.subr.mxu0 0.0
    %745 = vmatpush1.xpose.msra.mxu0 0.0
    %746 = vmatprep.subr.mxu0 0.0
    %747 = vmatpush1.xpose.msra.mxu0 0.0
    %748 = vmatprep.subr.mxu0 0.0
    %749 = vmatpush1.xpose.msra.mxu0 0.0
    %750 = vmatprep.subr.mxu0 0.0
    %751 = vmatpush1.xpose.msra.mxu0 0.0
    %752 = vmatprep.subr.mxu0 0.0
    %753 = vmatpush1.xpose.msra.mxu0 0.0
    %754 = vmatprep.subr.mxu0 0.0
    %755 = vmatpush1.xpose.msra.mxu0 0.0
    %756 = vmatprep.subr.mxu0 0.0
    %757 = vmatpush1.xpose.msra.mxu0 0.0
    %758 = vmatprep.subr.mxu0 0.0
    %759 = vmatpush1.xpose.msra.mxu0 0.0
    %760 = vmatprep.subr.mxu0 0.0
    %761 = vmatpush1.xpose.msra.mxu0 0.0
    %762 = vmatprep.subr.mxu0 0.0
    %763 = vmatpush1.xpose.msra.mxu0 0.0
    %764 = vmatprep.subr.mxu0 0.0
    %765 = vmatpush1.xpose.msra.mxu0 0.0
    %766 = vmatprep.mubr.f32.mxu0 0.0
    %767 = vmatmul.mubr.f32.gmra.mrb[0].mxu0 %v698
    %v768 = vpop.f32.mrb[0].mxu0
    %v769 = vadd.f32 0.0, %v768
    %v770 = vpop.f32.mrb[0].mxu0
    %771 = vdwg.mxu0
    %v772 = vsel %vm475, %v434, 0
    %v774 = vsel %vm475, %v448, 0
    %776 = vmatprep.subr.mxu0 0.0
    %777 = vmatpush1.xpose.msra.mxu0 %v774
    %778 = vmatprep.subr.mxu0 0.0
    %779 = vmatpush1.xpose.msra.mxu0 0.0
    %780 = vmatprep.subr.mxu0 0.0
    %781 = vmatpush1.xpose.msra.mxu0 0.0
    %782 = vmatprep.subr.mxu0 0.0
    %783 = vmatpush1.xpose.msra.mxu0 0.0
    %784 = vmatprep.subr.mxu0 0.0
    %785 = vmatpush1.xpose.msra.mxu0 0.0
    %786 = vmatprep.subr.mxu0 0.0
    %787 = vmatpush1.xpose.msra.mxu0 0.0
    %788 = vmatprep.subr.mxu0 0.0
    %789 = vmatpush1.xpose.msra.mxu0 0.0
    %790 = vmatprep.subr.mxu0 0.0
    %791 = vmatpush1.xpose.msra.mxu0 0.0
    %792 = vmatprep.subr.mxu0 0.0
    %793 = vmatpush1.xpose.msra.mxu0 0.0
    %794 = vmatprep.subr.mxu0 0.0
    %795 = vmatpush1.xpose.msra.mxu0 0.0
    %796 = vmatprep.subr.mxu0 0.0
    %797 = vmatpush1.xpose.msra.mxu0 0.0
    %798 = vmatprep.subr.mxu0 0.0
    %799 = vmatpush1.xpose.msra.mxu0 0.0
    %800 = vmatprep.subr.mxu0 0.0
    %801 = vmatpush1.xpose.msra.mxu0 0.0
    %802 = vmatprep.subr.mxu0 0.0
    %803 = vmatpush1.xpose.msra.mxu0 0.0
    %804 = vmatprep.subr.mxu0 0.0
    %805 = vmatpush1.xpose.msra.mxu0 0.0
    %806 = vmatprep.subr.mxu0 0.0
    %807 = vmatpush1.xpose.msra.mxu0 0.0
    %808 = vmatprep.subr.mxu0 0.0
    %809 = vmatpush1.xpose.msra.mxu0 0.0
    %810 = vmatprep.subr.mxu0 0.0
    %811 = vmatpush1.xpose.msra.mxu0 0.0
    %812 = vmatprep.subr.mxu0 0.0
    %813 = vmatpush1.xpose.msra.mxu0 0.0
    %814 = vmatprep.subr.mxu0 0.0
    %815 = vmatpush1.xpose.msra.mxu0 0.0
    %816 = vmatprep.subr.mxu0 0.0
    %817 = vmatpush1.xpose.msra.mxu0 0.0
    %818 = vmatprep.subr.mxu0 0.0
    %819 = vmatpush1.xpose.msra.mxu0 0.0
    %820 = vmatprep.subr.mxu0 0.0
    %821 = vmatpush1.xpose.msra.mxu0 0.0
    %822 = vmatprep.subr.mxu0 0.0
    %823 = vmatpush1.xpose.msra.mxu0 0.0
    %824 = vmatprep.subr.mxu0 0.0
    %825 = vmatpush1.xpose.msra.mxu0 0.0
    %826 = vmatprep.subr.mxu0 0.0
    %827 = vmatpush1.xpose.msra.mxu0 0.0
    %828 = vmatprep.subr.mxu0 0.0
    %829 = vmatpush1.xpose.msra.mxu0 0.0
    %830 = vmatprep.subr.mxu0 0.0
    %831 = vmatpush1.xpose.msra.mxu0 0.0
    %832 = vmatprep.subr.mxu0 0.0
    %833 = vmatpush1.xpose.msra.mxu0 0.0
    %834 = vmatprep.subr.mxu0 0.0
    %835 = vmatpush1.xpose.msra.mxu0 0.0
    %836 = vmatprep.subr.mxu0 0.0
    %837 = vmatpush1.xpose.msra.mxu0 0.0
    %838 = vmatprep.subr.mxu0 0.0
    %839 = vmatpush1.xpose.msra.mxu0 0.0
    %840 = vmatprep.mubr.f32.mxu0 0.0
    %841 = vmatmul.mubr.f32.gmra.mrb[0].mxu0 %v772
    %v842 = vpop.f32.mrb[0].mxu0
    %v843 = vadd.f32 0.0, %v842
    %v844 = vpop.f32.mrb[0].mxu0
    %845 = vdwg.mxu0
    %v846 = vsel %vm475, %v436, 0
    %v848 = vsel %vm475, %v450, 0
    %850 = vmatprep.subr.mxu0 0.0
    %851 = vmatpush1.xpose.msra.mxu0 %v848
    %852 = vmatprep.subr.mxu0 0.0
    %853 = vmatpush1.xpose.msra.mxu0 0.0
    %854 = vmatprep.subr.mxu0 0.0
    %855 = vmatpush1.xpose.msra.mxu0 0.0
    %856 = vmatprep.subr.mxu0 0.0
    %857 = vmatpush1.xpose.msra.mxu0 0.0
    %858 = vmatprep.subr.mxu0 0.0
    %859 = vmatpush1.xpose.msra.mxu0 0.0
    %860 = vmatprep.subr.mxu0 0.0
    %861 = vmatpush1.xpose.msra.mxu0 0.0
    %862 = vmatprep.subr.mxu0 0.0
    %863 = vmatpush1.xpose.msra.mxu0 0.0
    %864 = vmatprep.subr.mxu0 0.0
    %865 = vmatpush1.xpose.msra.mxu0 0.0
    %866 = vmatprep.subr.mxu0 0.0
    %867 = vmatpush1.xpose.msra.mxu0 0.0
    %868 = vmatprep.subr.mxu0 0.0
    %869 = vmatpush1.xpose.msra.mxu0 0.0
    %870 = vmatprep.subr.mxu0 0.0
    %871 = vmatpush1.xpose.msra.mxu0 0.0
    %872 = vmatprep.subr.mxu0 0.0
    %873 = vmatpush1.xpose.msra.mxu0 0.0
    %874 = vmatprep.subr.mxu0 0.0
    %875 = vmatpush1.xpose.msra.mxu0 0.0
    %876 = vmatprep.subr.mxu0 0.0
    %877 = vmatpush1.xpose.msra.mxu0 0.0
    %878 = vmatprep.subr.mxu0 0.0
    %879 = vmatpush1.xpose.msra.mxu0 0.0
    %880 = vmatprep.subr.mxu0 0.0
    %881 = vmatpush1.xpose.msra.mxu0 0.0
    %882 = vmatprep.subr.mxu0 0.0
    %883 = vmatpush1.xpose.msra.mxu0 0.0
    %884 = vmatprep.subr.mxu0 0.0
    %885 = vmatpush1.xpose.msra.mxu0 0.0
    %886 = vmatprep.subr.mxu0 0.0
    %887 = vmatpush1.xpose.msra.mxu0 0.0
    %888 = vmatprep.subr.mxu0 0.0
    %889 = vmatpush1.xpose.msra.mxu0 0.0
    %890 = vmatprep.subr.mxu0 0.0
    %891 = vmatpush1.xpose.msra.mxu0 0.0
    %892 = vmatprep.subr.mxu0 0.0
    %893 = vmatpush1.xpose.msra.mxu0 0.0
    %894 = vmatprep.subr.mxu0 0.0
    %895 = vmatpush1.xpose.msra.mxu0 0.0
    %896 = vmatprep.subr.mxu0 0.0
    %897 = vmatpush1.xpose.msra.mxu0 0.0
    %898 = vmatprep.subr.mxu0 0.0
    %899 = vmatpush1.xpose.msra.mxu0 0.0
    %900 = vmatprep.subr.mxu0 0.0
    %901 = vmatpush1.xpose.msra.mxu0 0.0
    %902 = vmatprep.subr.mxu0 0.0
    %903 = vmatpush1.xpose.msra.mxu0 0.0
    %904 = vmatprep.subr.mxu0 0.0
    %905 = vmatpush1.xpose.msra.mxu0 0.0
    %906 = vmatprep.subr.mxu0 0.0
    %907 = vmatpush1.xpose.msra.mxu0 0.0
    %908 = vmatprep.subr.mxu0 0.0
    %909 = vmatpush1.xpose.msra.mxu0 0.0
    %910 = vmatprep.subr.mxu0 0.0
    %911 = vmatpush1.xpose.msra.mxu0 0.0
    %912 = vmatprep.subr.mxu0 0.0
    %913 = vmatpush1.xpose.msra.mxu0 0.0
    %914 = vmatprep.mubr.f32.mxu0 0.0
    %915 = vmatmul.mubr.f32.gmra.mrb[0].mxu0 %v846
    %v916 = vpop.f32.mrb[0].mxu0
    %v917 = vadd.f32 0.0, %v916
    %v918 = vpop.f32.mrb[0].mxu0
    %919 = vdwg.mxu0
    %v920 = vsel %vm475, %v438, 0
    %v922 = vsel %vm475, %v452, 0
    %924 = vmatprep.subr.mxu0 0.0
    %925 = vmatpush1.xpose.msra.mxu0 %v922
    %926 = vmatprep.subr.mxu0 0.0
    %927 = vmatpush1.xpose.msra.mxu0 0.0
    %928 = vmatprep.subr.mxu0 0.0
    %929 = vmatpush1.xpose.msra.mxu0 0.0
    %930 = vmatprep.subr.mxu0 0.0
    %931 = vmatpush1.xpose.msra.mxu0 0.0
    %932 = vmatprep.subr.mxu0 0.0
    %933 = vmatpush1.xpose.msra.mxu0 0.0
    %934 = vmatprep.subr.mxu0 0.0
    %935 = vmatpush1.xpose.msra.mxu0 0.0
    %936 = vmatprep.subr.mxu0 0.0
    %937 = vmatpush1.xpose.msra.mxu0 0.0
    %938 = vmatprep.subr.mxu0 0.0
    %939 = vmatpush1.xpose.msra.mxu0 0.0
    %940 = vmatprep.subr.mxu0 0.0
    %941 = vmatpush1.xpose.msra.mxu0 0.0
    %942 = vmatprep.subr.mxu0 0.0
    %943 = vmatpush1.xpose.msra.mxu0 0.0
    %944 = vmatprep.subr.mxu0 0.0
    %945 = vmatpush1.xpose.msra.mxu0 0.0
    %946 = vmatprep.subr.mxu0 0.0
    %947 = vmatpush1.xpose.msra.mxu0 0.0
    %948 = vmatprep.subr.mxu0 0.0
    %949 = vmatpush1.xpose.msra.mxu0 0.0
    %950 = vmatprep.subr.mxu0 0.0
    %951 = vmatpush1.xpose.msra.mxu0 0.0
    %952 = vmatprep.subr.mxu0 0.0
    %953 = vmatpush1.xpose.msra.mxu0 0.0
    %954 = vmatprep.subr.mxu0 0.0
    %955 = vmatpush1.xpose.msra.mxu0 0.0
    %956 = vmatprep.subr.mxu0 0.0
    %957 = vmatpush1.xpose.msra.mxu0 0.0
    %958 = vmatprep.subr.mxu0 0.0
    %959 = vmatpush1.xpose.msra.mxu0 0.0
    %960 = vmatprep.subr.mxu0 0.0
    %961 = vmatpush1.xpose.msra.mxu0 0.0
    %962 = vmatprep.subr.mxu0 0.0
    %963 = vmatpush1.xpose.msra.mxu0 0.0
    %964 = vmatprep.subr.mxu0 0.0
    %965 = vmatpush1.xpose.msra.mxu0 0.0
    %966 = vmatprep.subr.mxu0 0.0
    %967 = vmatpush1.xpose.msra.mxu0 0.0
    %968 = vmatprep.subr.mxu0 0.0
    %969 = vmatpush1.xpose.msra.mxu0 0.0
    %970 = vmatprep.subr.mxu0 0.0
    %971 = vmatpush1.xpose.msra.mxu0 0.0
    %972 = vmatprep.subr.mxu0 0.0
    %973 = vmatpush1.xpose.msra.mxu0 0.0
    %974 = vmatprep.subr.mxu0 0.0
    %975 = vmatpush1.xpose.msra.mxu0 0.0
    %976 = vmatprep.subr.mxu0 0.0
    %977 = vmatpush1.xpose.msra.mxu0 0.0
    %978 = vmatprep.subr.mxu0 0.0
    %979 = vmatpush1.xpose.msra.mxu0 0.0
    %980 = vmatprep.subr.mxu0 0.0
    %981 = vmatpush1.xpose.msra.mxu0 0.0
    %982 = vmatprep.subr.mxu0 0.0
    %983 = vmatpush1.xpose.msra.mxu0 0.0
    %984 = vmatprep.subr.mxu0 0.0
    %985 = vmatpush1.xpose.msra.mxu0 0.0
    %986 = vmatprep.subr.mxu0 0.0
    %987 = vmatpush1.xpose.msra.mxu0 0.0
    %988 = vmatprep.mubr.f32.mxu0 0.0
    %989 = vmatmul.mubr.f32.gmra.mrb[0].mxu0 %v920
    %v990 = vpop.f32.mrb[0].mxu0
    %v991 = vadd.f32 0.0, %v990
    %v992 = vpop.f32.mrb[0].mxu0
    %993 = vdwg.mxu0
    %v994 = vsel %vm475, %v440, 0
    %v996 = vsel %vm475, %v454, 0
    %998 = vmatprep.subr.mxu0 0.0
    %999 = vmatpush1.xpose.msra.mxu0 %v996
    %1000 = vmatprep.subr.mxu0 0.0
    %1001 = vmatpush1.xpose.msra.mxu0 0.0
    %1002 = vmatprep.subr.mxu0 0.0
    %1003 = vmatpush1.xpose.msra.mxu0 0.0
    %1004 = vmatprep.subr.mxu0 0.0
    %1005 = vmatpush1.xpose.msra.mxu0 0.0
    %1006 = vmatprep.subr.mxu0 0.0
    %1007 = vmatpush1.xpose.msra.mxu0 0.0
    %1008 = vmatprep.subr.mxu0 0.0
    %1009 = vmatpush1.xpose.msra.mxu0 0.0
    %1010 = vmatprep.subr.mxu0 0.0
    %1011 = vmatpush1.xpose.msra.mxu0 0.0
    %1012 = vmatprep.subr.mxu0 0.0
    %1013 = vmatpush1.xpose.msra.mxu0 0.0
    %1014 = vmatprep.subr.mxu0 0.0
    %1015 = vmatpush1.xpose.msra.mxu0 0.0
    %1016 = vmatprep.subr.mxu0 0.0
    %1017 = vmatpush1.xpose.msra.mxu0 0.0
    %1018 = vmatprep.subr.mxu0 0.0
    %1019 = vmatpush1.xpose.msra.mxu0 0.0
    %1020 = vmatprep.subr.mxu0 0.0
    %1021 = vmatpush1.xpose.msra.mxu0 0.0
    %1022 = vmatprep.subr.mxu0 0.0
    %1023 = vmatpush1.xpose.msra.mxu0 0.0
    %1024 = vmatprep.subr.mxu0 0.0
    %1025 = vmatpush1.xpose.msra.mxu0 0.0
    %1026 = vmatprep.subr.mxu0 0.0
    %1027 = vmatpush1.xpose.msra.mxu0 0.0
    %1028 = vmatprep.subr.mxu0 0.0
    %1029 = vmatpush1.xpose.msra.mxu0 0.0
    %1030 = vmatprep.subr.mxu0 0.0
    %1031 = vmatpush1.xpose.msra.mxu0 0.0
    %1032 = vmatprep.subr.mxu0 0.0
    %1033 = vmatpush1.xpose.msra.mxu0 0.0
    %1034 = vmatprep.subr.mxu0 0.0
    %1035 = vmatpush1.xpose.msra.mxu0 0.0
    %1036 = vmatprep.subr.mxu0 0.0
    %1037 = vmatpush1.xpose.msra.mxu0 0.0
    %1038 = vmatprep.subr.mxu0 0.0
    %1039 = vmatpush1.xpose.msra.mxu0 0.0
    %1040 = vmatprep.subr.mxu0 0.0
    %1041 = vmatpush1.xpose.msra.mxu0 0.0
    %1042 = vmatprep.subr.mxu0 0.0
    %1043 = vmatpush1.xpose.msra.mxu0 0.0
    %1044 = vmatprep.subr.mxu0 0.0
    %1045 = vmatpush1.xpose.msra.mxu0 0.0
    %1046 = vmatprep.subr.mxu0 0.0
    %1047 = vmatpush1.xpose.msra.mxu0 0.0
    %1048 = vmatprep.subr.mxu0 0.0
    %1049 = vmatpush1.xpose.msra.mxu0 0.0
    %1050 = vmatprep.subr.mxu0 0.0
    %1051 = vmatpush1.xpose.msra.mxu0 0.0
    %1052 = vmatprep.subr.mxu0 0.0
    %1053 = vmatpush1.xpose.msra.mxu0 0.0
    %1054 = vmatprep.subr.mxu0 0.0
    %1055 = vmatpush1.xpose.msra.mxu0 0.0
    %1056 = vmatprep.subr.mxu0 0.0
    %1057 = vmatpush1.xpose.msra.mxu0 0.0
    %1058 = vmatprep.subr.mxu0 0.0
    %1059 = vmatpush1.xpose.msra.mxu0 0.0
    %1060 = vmatprep.subr.mxu0 0.0
    %1061 = vmatpush1.xpose.msra.mxu0 0.0
    %1062 = vmatprep.mubr.f32.mxu0 0.0
    %1063 = vmatmul.mubr.f32.gmra.mrb[0].mxu0 %v994
    %v1064 = vpop.f32.mrb[0].mxu0
    %v1065 = vadd.f32 0.0, %v1064
    %v1066 = vpop.f32.mrb[0].mxu0
    %1067 = vdwg.mxu0
    %v1068 = vsel %vm475, %v547, -inf
    %1069 = vmax.xlane.f32.xlu0 %v1068
    %v1070 = vpop.xlane.xlu0 %1069
    %v1071 = vsel %vm475, %v621, -inf
    %1072 = vmax.xlane.f32.xlu0 %v1071
    %v1073 = vpop.xlane.xlu0 %1072
    %v1074 = vsel %vm475, %v695, -inf
    %1075 = vmax.xlane.f32.xlu0 %v1074
    %v1076 = vpop.xlane.xlu0 %1075
    %v1077 = vsel %vm475, %v769, -inf
    %1078 = vmax.xlane.f32.xlu0 %v1077
    %v1079 = vpop.xlane.xlu0 %1078
    %v1080 = vsel %vm475, %v843, -inf
    %1081 = vmax.xlane.f32.xlu0 %v1080
    %v1082 = vpop.xlane.xlu0 %1081
    %v1083 = vsel %vm475, %v917, -inf
    %1084 = vmax.xlane.f32.xlu0 %v1083
    %v1085 = vpop.xlane.xlu0 %1084
    %v1086 = vsel %vm475, %v991, -inf
    %1087 = vmax.xlane.f32.xlu0 %v1086
    %v1088 = vpop.xlane.xlu0 %1087
    %v1089 = vsel %vm475, %v1065, -inf
    %1090 = vmax.xlane.f32.xlu0 %v1089
    %v1091 = vpop.xlane.xlu0 %1090
    %v1092 = vsub.f32 %v547, %v1070
    %v1093 = vsub.f32 %v621, %v1073
    %v1094 = vsub.f32 %v695, %v1076
    %v1095 = vsub.f32 %v769, %v1079
    %v1096 = vsub.f32 %v843, %v1082
    %v1097 = vsub.f32 %v917, %v1085
    %v1098 = vsub.f32 %v991, %v1088
    %v1099 = vsub.f32 %v1065, %v1091
    %v1100 = vmul.f32 %v1092, 1.442695
    %v1101 = vpow.pop %v1100
    %v1102 = vmul.f32 %v1093, 1.442695
    %v1103 = vpow.pop %v1102
    %v1104 = vmul.f32 %v1094, 1.442695
    %v1105 = vpow.pop %v1104
    %v1106 = vmul.f32 %v1095, 1.442695
    %v1107 = vpow.pop %v1106
    %v1108 = vmul.f32 %v1096, 1.442695
    %v1109 = vpow.pop %v1108
    %v1110 = vmul.f32 %v1097, 1.442695
    %v1111 = vpow.pop %v1110
    %v1112 = vmul.f32 %v1098, 1.442695
    %v1113 = vpow.pop %v1112
    %v1114 = vmul.f32 %v1099, 1.442695
    %v1115 = vpow.pop %v1114
    %v1116 = vsel %vm475, %v1101, 0.0
    %1117 = vadd.xlane.f32.xlu0 %v1116
    %v1118 = vpop.xlane.xlu0 %1117
    %v1119 = vsel %vm475, %v1103, 0.0
    %1120 = vadd.xlane.f32.xlu0 %v1119
    %v1121 = vpop.xlane.xlu0 %1120
    %v1122 = vsel %vm475, %v1105, 0.0
    %1123 = vadd.xlane.f32.xlu0 %v1122
    %v1124 = vpop.xlane.xlu0 %1123
    %v1125 = vsel %vm475, %v1107, 0.0
    %1126 = vadd.xlane.f32.xlu0 %v1125
    %v1127 = vpop.xlane.xlu0 %1126
    %v1128 = vsel %vm475, %v1109, 0.0
    %1129 = vadd.xlane.f32.xlu0 %v1128
    %v1130 = vpop.xlane.xlu0 %1129
    %v1131 = vsel %vm475, %v1111, 0.0
    %1132 = vadd.xlane.f32.xlu0 %v1131
    %v1133 = vpop.xlane.xlu0 %1132
    %v1134 = vsel %vm475, %v1113, 0.0
    %1135 = vadd.xlane.f32.xlu0 %v1134
    %v1136 = vpop.xlane.xlu0 %1135
    %v1137 = vsel %vm475, %v1115, 0.0
    %1138 = vadd.xlane.f32.xlu0 %v1137
    %v1139 = vpop.xlane.xlu0 %1138
    %v1140 = vrcp.pop %v1118
    %v1141 = vrcp.pop %v1121
    %v1142 = vrcp.pop %v1124
    %v1143 = vrcp.pop %v1127
    %v1144 = vrcp.pop %v1130
    %v1145 = vrcp.pop %v1133
    %v1146 = vrcp.pop %v1136
    %v1147 = vrcp.pop %v1139
    %v1148 = vmul.f32 %v1101, %v1140
    %v1149 = vmul.f32 %v1103, %v1141
    %v1150 = vmul.f32 %v1105, %v1142
    %v1151 = vmul.f32 %v1107, %v1143
    %v1152 = vmul.f32 %v1109, %v1144
    %v1153 = vmul.f32 %v1111, %v1145
    %v1154 = vmul.f32 %v1113, %v1146
    %v1155 = vmul.f32 %v1115, %v1147
    %v1157 = vsel %vm475, %v1148, 0
    %1159 = vmatprep.subr.mxu0 0.0
    %1160 = vmatpush1.msra.mxu0 %v419
    %1161 = vmatprep.subr.mxu0 0.0
    %1162 = vmatpush1.msra.mxu0 0.0
    %1163 = vmatprep.subr.mxu0 0.0
    %1164 = vmatpush1.msra.mxu0 0.0
    %1165 = vmatprep.subr.mxu0 0.0
    %1166 = vmatpush1.msra.mxu0 0.0
    %1167 = vmatprep.subr.mxu0 0.0
    %1168 = vmatpush1.msra.mxu0 0.0
    %1169 = vmatprep.subr.mxu0 0.0
    %1170 = vmatpush1.msra.mxu0 0.0
    %1171 = vmatprep.subr.mxu0 0.0
    %1172 = vmatpush1.msra.mxu0 0.0
    %1173 = vmatprep.subr.mxu0 0.0
    %1174 = vmatpush1.msra.mxu0 0.0
    %1175 = vmatprep.subr.mxu0 0.0
    %1176 = vmatpush1.msra.mxu0 0.0
    %1177 = vmatprep.subr.mxu0 0.0
    %1178 = vmatpush1.msra.mxu0 0.0
    %1179 = vmatprep.subr.mxu0 0.0
    %1180 = vmatpush1.msra.mxu0 0.0
    %1181 = vmatprep.subr.mxu0 0.0
    %1182 = vmatpush1.msra.mxu0 0.0
    %1183 = vmatprep.subr.mxu0 0.0
    %1184 = vmatpush1.msra.mxu0 0.0
    %1185 = vmatprep.subr.mxu0 0.0
    %1186 = vmatpush1.msra.mxu0 0.0
    %1187 = vmatprep.subr.mxu0 0.0
    %1188 = vmatpush1.msra.mxu0 0.0
    %1189 = vmatprep.subr.mxu0 0.0
    %1190 = vmatpush1.msra.mxu0 0.0
    %1191 = vmatprep.subr.mxu0 0.0
    %1192 = vmatpush1.msra.mxu0 0.0
    %1193 = vmatprep.subr.mxu0 0.0
    %1194 = vmatpush1.msra.mxu0 0.0
    %1195 = vmatprep.subr.mxu0 0.0
    %1196 = vmatpush1.msra.mxu0 0.0
    %1197 = vmatprep.subr.mxu0 0.0
    %1198 = vmatpush1.msra.mxu0 0.0
    %1199 = vmatprep.subr.mxu0 0.0
    %1200 = vmatpush1.msra.mxu0 0.0
    %1201 = vmatprep.subr.mxu0 0.0
    %1202 = vmatpush1.msra.mxu0 0.0
    %1203 = vmatprep.subr.mxu0 0.0
    %1204 = vmatpush1.msra.mxu0 0.0
    %1205 = vmatprep.subr.mxu0 0.0
    %1206 = vmatpush1.msra.mxu0 0.0
    %1207 = vmatprep.subr.mxu0 0.0
    %1208 = vmatpush1.msra.mxu0 0.0
    %1209 = vmatprep.subr.mxu0 0.0
    %1210 = vmatpush1.msra.mxu0 0.0
    %1211 = vmatprep.subr.mxu0 0.0
    %1212 = vmatpush1.msra.mxu0 0.0
    %1213 = vmatprep.subr.mxu0 0.0
    %1214 = vmatpush1.msra.mxu0 0.0
    %1215 = vmatprep.subr.mxu0 0.0
    %1216 = vmatpush1.msra.mxu0 0.0
    %1217 = vmatprep.subr.mxu0 0.0
    %1218 = vmatpush1.msra.mxu0 0.0
    %1219 = vmatprep.subr.mxu0 0.0
    %1220 = vmatpush1.msra.mxu0 0.0
    %1221 = vmatprep.subr.mxu0 0.0
    %1222 = vmatpush1.msra.mxu0 0.0
    %1223 = vmatprep.mubr.f32.mxu0 0.0
    %1224 = vmatmul.mubr.f32.gmra.mrb[0].mxu0 %v1157
    %v1225 = vpop.f32.mrb[0].mxu0
    %v1226 = vadd.f32 0.0, %v1225
    %v1227 = vpop.f32.mrb[0].mxu0
    %1228 = vdwg.mxu0
    %v1230 = vsel %vm475, %v1149, 0
    %1232 = vmatprep.subr.mxu0 0.0
    %1233 = vmatpush1.msra.mxu0 %v424
    %1234 = vmatprep.subr.mxu0 0.0
    %1235 = vmatpush1.msra.mxu0 0.0
    %1236 = vmatprep.subr.mxu0 0.0
    %1237 = vmatpush1.msra.mxu0 0.0
    %1238 = vmatprep.subr.mxu0 0.0
    %1239 = vmatpush1.msra.mxu0 0.0
    %1240 = vmatprep.subr.mxu0 0.0
    %1241 = vmatpush1.msra.mxu0 0.0
    %1242 = vmatprep.subr.mxu0 0.0
    %1243 = vmatpush1.msra.mxu0 0.0
    %1244 = vmatprep.subr.mxu0 0.0
    %1245 = vmatpush1.msra.mxu0 0.0
    %1246 = vmatprep.subr.mxu0 0.0
    %1247 = vmatpush1.msra.mxu0 0.0
    %1248 = vmatprep.subr.mxu0 0.0
    %1249 = vmatpush1.msra.mxu0 0.0
    %1250 = vmatprep.subr.mxu0 0.0
    %1251 = vmatpush1.msra.mxu0 0.0
    %1252 = vmatprep.subr.mxu0 0.0
    %1253 = vmatpush1.msra.mxu0 0.0
    %1254 = vmatprep.subr.mxu0 0.0
    %1255 = vmatpush1.msra.mxu0 0.0
    %1256 = vmatprep.subr.mxu0 0.0
    %1257 = vmatpush1.msra.mxu0 0.0
    %1258 = vmatprep.subr.mxu0 0.0
    %1259 = vmatpush1.msra.mxu0 0.0
    %1260 = vmatprep.subr.mxu0 0.0
    %1261 = vmatpush1.msra.mxu0 0.0
    %1262 = vmatprep.subr.mxu0 0.0
    %1263 = vmatpush1.msra.mxu0 0.0
    %1264 = vmatprep.subr.mxu0 0.0
    %1265 = vmatpush1.msra.mxu0 0.0
    %1266 = vmatprep.subr.mxu0 0.0
    %1267 = vmatpush1.msra.mxu0 0.0
    %1268 = vmatprep.subr.mxu0 0.0
    %1269 = vmatpush1.msra.mxu0 0.0
    %1270 = vmatprep.subr.mxu0 0.0
    %1271 = vmatpush1.msra.mxu0 0.0
    %1272 = vmatprep.subr.mxu0 0.0
    %1273 = vmatpush1.msra.mxu0 0.0
    %1274 = vmatprep.subr.mxu0 0.0
    %1275 = vmatpush1.msra.mxu0 0.0
    %1276 = vmatprep.subr.mxu0 0.0
    %1277 = vmatpush1.msra.mxu0 0.0
    %1278 = vmatprep.subr.mxu0 0.0
    %1279 = vmatpush1.msra.mxu0 0.0
    %1280 = vmatprep.subr.mxu0 0.0
    %1281 = vmatpush1.msra.mxu0 0.0
    %1282 = vmatprep.subr.mxu0 0.0
    %1283 = vmatpush1.msra.mxu0 0.0
    %1284 = vmatprep.subr.mxu0 0.0
    %1285 = vmatpush1.msra.mxu0 0.0
    %1286 = vmatprep.subr.mxu0 0.0
    %1287 = vmatpush1.msra.mxu0 0.0
    %1288 = vmatprep.subr.mxu0 0.0
    %1289 = vmatpush1.msra.mxu0 0.0
    %1290 = vmatprep.subr.mxu0 0.0
    %1291 = vmatpush1.msra.mxu0 0.0
    %1292 = vmatprep.subr.mxu0 0.0
    %1293 = vmatpush1.msra.mxu0 0.0
    %1294 = vmatprep.subr.mxu0 0.0
    %1295 = vmatpush1.msra.mxu0 0.0
    %1296 = vmatprep.mubr.f32.mxu0 0.0
    %1297 = vmatmul.mubr.f32.gmra.mrb[0].mxu0 %v1230
    %v1298 = vpop.f32.mrb[0].mxu0
    %v1299 = vadd.f32 0.0, %v1298
    %v1300 = vpop.f32.mrb[0].mxu0
    %1301 = vdwg.mxu0
    %v1303 = vsel %vm475, %v1150, 0
    %1305 = vmatprep.subr.mxu0 0.0
    %1306 = vmatpush1.msra.mxu0 %v458
    %1307 = vmatprep.subr.mxu0 0.0
    %1308 = vmatpush1.msra.mxu0 0.0
    %1309 = vmatprep.subr.mxu0 0.0
    %1310 = vmatpush1.msra.mxu0 0.0
    %1311 = vmatprep.subr.mxu0 0.0
    %1312 = vmatpush1.msra.mxu0 0.0
    %1313 = vmatprep.subr.mxu0 0.0
    %1314 = vmatpush1.msra.mxu0 0.0
    %1315 = vmatprep.subr.mxu0 0.0
    %1316 = vmatpush1.msra.mxu0 0.0
    %1317 = vmatprep.subr.mxu0 0.0
    %1318 = vmatpush1.msra.mxu0 0.0
    %1319 = vmatprep.subr.mxu0 0.0
    %1320 = vmatpush1.msra.mxu0 0.0
    %1321 = vmatprep.subr.mxu0 0.0
    %1322 = vmatpush1.msra.mxu0 0.0
    %1323 = vmatprep.subr.mxu0 0.0
    %1324 = vmatpush1.msra.mxu0 0.0
    %1325 = vmatprep.subr.mxu0 0.0
    %1326 = vmatpush1.msra.mxu0 0.0
    %1327 = vmatprep.subr.mxu0 0.0
    %1328 = vmatpush1.msra.mxu0 0.0
    %1329 = vmatprep.subr.mxu0 0.0
    %1330 = vmatpush1.msra.mxu0 0.0
    %1331 = vmatprep.subr.mxu0 0.0
    %1332 = vmatpush1.msra.mxu0 0.0
    %1333 = vmatprep.subr.mxu0 0.0
    %1334 = vmatpush1.msra.mxu0 0.0
    %1335 = vmatprep.subr.mxu0 0.0
    %1336 = vmatpush1.msra.mxu0 0.0
    %1337 = vmatprep.subr.mxu0 0.0
    %1338 = vmatpush1.msra.mxu0 0.0
    %1339 = vmatprep.subr.mxu0 0.0
    %1340 = vmatpush1.msra.mxu0 0.0
    %1341 = vmatprep.subr.mxu0 0.0
    %1342 = vmatpush1.msra.mxu0 0.0
    %1343 = vmatprep.subr.mxu0 0.0
    %1344 = vmatpush1.msra.mxu0 0.0
    %1345 = vmatprep.subr.mxu0 0.0
    %1346 = vmatpush1.msra.mxu0 0.0
    %1347 = vmatprep.subr.mxu0 0.0
    %1348 = vmatpush1.msra.mxu0 0.0
    %1349 = vmatprep.subr.mxu0 0.0
    %1350 = vmatpush1.msra.mxu0 0.0
    %1351 = vmatprep.subr.mxu0 0.0
    %1352 = vmatpush1.msra.mxu0 0.0
    %1353 = vmatprep.subr.mxu0 0.0
    %1354 = vmatpush1.msra.mxu0 0.0
    %1355 = vmatprep.subr.mxu0 0.0
    %1356 = vmatpush1.msra.mxu0 0.0
    %1357 = vmatprep.subr.mxu0 0.0
    %1358 = vmatpush1.msra.mxu0 0.0
    %1359 = vmatprep.subr.mxu0 0.0
    %1360 = vmatpush1.msra.mxu0 0.0
    %1361 = vmatprep.subr.mxu0 0.0
    %1362 = vmatpush1.msra.mxu0 0.0
    %1363 = vmatprep.subr.mxu0 0.0
    %1364 = vmatpush1.msra.mxu0 0.0
    %1365 = vmatprep.subr.mxu0 0.0
    %1366 = vmatpush1.msra.mxu0 0.0
    %1367 = vmatprep.subr.mxu0 0.0
    %1368 = vmatpush1.msra.mxu0 0.0
    %1369 = vmatprep.mubr.f32.mxu0 0.0
    %1370 = vmatmul.mubr.f32.gmra.mrb[0].mxu0 %v1303
    %v1371 = vpop.f32.mrb[0].mxu0
    %v1372 = vadd.f32 0.0, %v1371
    %v1373 = vpop.f32.mrb[0].mxu0
    %1374 = vdwg.mxu0
    %v1376 = vsel %vm475, %v1151, 0
    %1378 = vmatprep.subr.mxu0 0.0
    %1379 = vmatpush1.msra.mxu0 %v460
    %1380 = vmatprep.subr.mxu0 0.0
    %1381 = vmatpush1.msra.mxu0 0.0
    %1382 = vmatprep.subr.mxu0 0.0
    %1383 = vmatpush1.msra.mxu0 0.0
    %1384 = vmatprep.subr.mxu0 0.0
    %1385 = vmatpush1.msra.mxu0 0.0
    %1386 = vmatprep.subr.mxu0 0.0
    %1387 = vmatpush1.msra.mxu0 0.0
    %1388 = vmatprep.subr.mxu0 0.0
    %1389 = vmatpush1.msra.mxu0 0.0
    %1390 = vmatprep.subr.mxu0 0.0
    %1391 = vmatpush1.msra.mxu0 0.0
    %1392 = vmatprep.subr.mxu0 0.0
    %1393 = vmatpush1.msra.mxu0 0.0
    %1394 = vmatprep.subr.mxu0 0.0
    %1395 = vmatpush1.msra.mxu0 0.0
    %1396 = vmatprep.subr.mxu0 0.0
    %1397 = vmatpush1.msra.mxu0 0.0
    %1398 = vmatprep.subr.mxu0 0.0
    %1399 = vmatpush1.msra.mxu0 0.0
    %1400 = vmatprep.subr.mxu0 0.0
    %1401 = vmatpush1.msra.mxu0 0.0
    %1402 = vmatprep.subr.mxu0 0.0
    %1403 = vmatpush1.msra.mxu0 0.0
    %1404 = vmatprep.subr.mxu0 0.0
    %1405 = vmatpush1.msra.mxu0 0.0
    %1406 = vmatprep.subr.mxu0 0.0
    %1407 = vmatpush1.msra.mxu0 0.0
    %1408 = vmatprep.subr.mxu0 0.0
    %1409 = vmatpush1.msra.mxu0 0.0
    %1410 = vmatprep.subr.mxu0 0.0
    %1411 = vmatpush1.msra.mxu0 0.0
    %1412 = vmatprep.subr.mxu0 0.0
    %1413 = vmatpush1.msra.mxu0 0.0
    %1414 = vmatprep.subr.mxu0 0.0
    %1415 = vmatpush1.msra.mxu0 0.0
    %1416 = vmatprep.subr.mxu0 0.0
    %1417 = vmatpush1.msra.mxu0 0.0
    %1418 = vmatprep.subr.mxu0 0.0
    %1419 = vmatpush1.msra.mxu0 0.0
    %1420 = vmatprep.subr.mxu0 0.0
    %1421 = vmatpush1.msra.mxu0 0.0
    %1422 = vmatprep.subr.mxu0 0.0
    %1423 = vmatpush1.msra.mxu0 0.0
    %1424 = vmatprep.subr.mxu0 0.0
    %1425 = vmatpush1.msra.mxu0 0.0
    %1426 = vmatprep.subr.mxu0 0.0
    %1427 = vmatpush1.msra.mxu0 0.0
    %1428 = vmatprep.subr.mxu0 0.0
    %1429 = vmatpush1.msra.mxu0 0.0
    %1430 = vmatprep.subr.mxu0 0.0
    %1431 = vmatpush1.msra.mxu0 0.0
    %1432 = vmatprep.subr.mxu0 0.0
    %1433 = vmatpush1.msra.mxu0 0.0
    %1434 = vmatprep.subr.mxu0 0.0
    %1435 = vmatpush1.msra.mxu0 0.0
    %1436 = vmatprep.subr.mxu0 0.0
    %1437 = vmatpush1.msra.mxu0 0.0
    %1438 = vmatprep.subr.mxu0 0.0
    %1439 = vmatpush1.msra.mxu0 0.0
    %1440 = vmatprep.subr.mxu0 0.0
    %1441 = vmatpush1.msra.mxu0 0.0
    %1442 = vmatprep.mubr.f32.mxu0 0.0
    %1443 = vmatmul.mubr.f32.gmra.mrb[0].mxu0 %v1376
    %v1444 = vpop.f32.mrb[0].mxu0
    %v1445 = vadd.f32 0.0, %v1444
    %v1446 = vpop.f32.mrb[0].mxu0
    %1447 = vdwg.mxu0
    %v1449 = vsel %vm475, %v1152, 0
    %1451 = vmatprep.subr.mxu0 0.0
    %1452 = vmatpush1.msra.mxu0 %v464
    %1453 = vmatprep.subr.mxu0 0.0
    %1454 = vmatpush1.msra.mxu0 0.0
    %1455 = vmatprep.subr.mxu0 0.0
    %1456 = vmatpush1.msra.mxu0 0.0
    %1457 = vmatprep.subr.mxu0 0.0
    %1458 = vmatpush1.msra.mxu0 0.0
    %1459 = vmatprep.subr.mxu0 0.0
    %1460 = vmatpush1.msra.mxu0 0.0
    %1461 = vmatprep.subr.mxu0 0.0
    %1462 = vmatpush1.msra.mxu0 0.0
    %1463 = vmatprep.subr.mxu0 0.0
    %1464 = vmatpush1.msra.mxu0 0.0
    %1465 = vmatprep.subr.mxu0 0.0
    %1466 = vmatpush1.msra.mxu0 0.0
    %1467 = vmatprep.subr.mxu0 0.0
    %1468 = vmatpush1.msra.mxu0 0.0
    %1469 = vmatprep.subr.mxu0 0.0
    %1470 = vmatpush1.msra.mxu0 0.0
    %1471 = vmatprep.subr.mxu0 0.0
    %1472 = vmatpush1.msra.mxu0 0.0
    %1473 = vmatprep.subr.mxu0 0.0
    %1474 = vmatpush1.msra.mxu0 0.0
    %1475 = vmatprep.subr.mxu0 0.0
    %1476 = vmatpush1.msra.mxu0 0.0
    %1477 = vmatprep.subr.mxu0 0.0
    %1478 = vmatpush1.msra.mxu0 0.0
    %1479 = vmatprep.subr.mxu0 0.0
    %1480 = vmatpush1.msra.mxu0 0.0
    %1481 = vmatprep.subr.mxu0 0.0
    %1482 = vmatpush1.msra.mxu0 0.0
    %1483 = vmatprep.subr.mxu0 0.0
    %1484 = vmatpush1.msra.mxu0 0.0
    %1485 = vmatprep.subr.mxu0 0.0
    %1486 = vmatpush1.msra.mxu0 0.0
    %1487 = vmatprep.subr.mxu0 0.0
    %1488 = vmatpush1.msra.mxu0 0.0
    %1489 = vmatprep.subr.mxu0 0.0
    %1490 = vmatpush1.msra.mxu0 0.0
    %1491 = vmatprep.subr.mxu0 0.0
    %1492 = vmatpush1.msra.mxu0 0.0
    %1493 = vmatprep.subr.mxu0 0.0
    %1494 = vmatpush1.msra.mxu0 0.0
    %1495 = vmatprep.subr.mxu0 0.0
    %1496 = vmatpush1.msra.mxu0 0.0
    %1497 = vmatprep.subr.mxu0 0.0
    %1498 = vmatpush1.msra.mxu0 0.0
    %1499 = vmatprep.subr.mxu0 0.0
    %1500 = vmatpush1.msra.mxu0 0.0
    %1501 = vmatprep.subr.mxu0 0.0
    %1502 = vmatpush1.msra.mxu0 0.0
    %1503 = vmatprep.subr.mxu0 0.0
    %1504 = vmatpush1.msra.mxu0 0.0
    %1505 = vmatprep.subr.mxu0 0.0
    %1506 = vmatpush1.msra.mxu0 0.0
    %1507 = vmatprep.subr.mxu0 0.0
    %1508 = vmatpush1.msra.mxu0 0.0
    %1509 = vmatprep.subr.mxu0 0.0
    %1510 = vmatpush1.msra.mxu0 0.0
    %1511 = vmatprep.subr.mxu0 0.0
    %1512 = vmatpush1.msra.mxu0 0.0
    %1513 = vmatprep.subr.mxu0 0.0
    %1514 = vmatpush1.msra.mxu0 0.0
    %1515 = vmatprep.mubr.f32.mxu0 0.0
    %1516 = vmatmul.mubr.f32.gmra.mrb[0].mxu0 %v1449
    %v1517 = vpop.f32.mrb[0].mxu0
    %v1518 = vadd.f32 0.0, %v1517
    %v1519 = vpop.f32.mrb[0].mxu0
    %1520 = vdwg.mxu0
    %v1522 = vsel %vm475, %v1153, 0
    %1524 = vmatprep.subr.mxu0 0.0
    %1525 = vmatpush1.msra.mxu0 %v466
    %1526 = vmatprep.subr.mxu0 0.0
    %1527 = vmatpush1.msra.mxu0 0.0
    %1528 = vmatprep.subr.mxu0 0.0
    %1529 = vmatpush1.msra.mxu0 0.0
    %1530 = vmatprep.subr.mxu0 0.0
    %1531 = vmatpush1.msra.mxu0 0.0
    %1532 = vmatprep.subr.mxu0 0.0
    %1533 = vmatpush1.msra.mxu0 0.0
    %1534 = vmatprep.subr.mxu0 0.0
    %1535 = vmatpush1.msra.mxu0 0.0
    %1536 = vmatprep.subr.mxu0 0.0
    %1537 = vmatpush1.msra.mxu0 0.0
    %1538 = vmatprep.subr.mxu0 0.0
    %1539 = vmatpush1.msra.mxu0 0.0
    %1540 = vmatprep.subr.mxu0 0.0
    %1541 = vmatpush1.msra.mxu0 0.0
    %1542 = vmatprep.subr.mxu0 0.0
    %1543 = vmatpush1.msra.mxu0 0.0
    %1544 = vmatprep.subr.mxu0 0.0
    %1545 = vmatpush1.msra.mxu0 0.0
    %1546 = vmatprep.subr.mxu0 0.0
    %1547 = vmatpush1.msra.mxu0 0.0
    %1548 = vmatprep.subr.mxu0 0.0
    %1549 = vmatpush1.msra.mxu0 0.0
    %1550 = vmatprep.subr.mxu0 0.0
    %1551 = vmatpush1.msra.mxu0 0.0
    %1552 = vmatprep.subr.mxu0 0.0
    %1553 = vmatpush1.msra.mxu0 0.0
    %1554 = vmatprep.subr.mxu0 0.0
    %1555 = vmatpush1.msra.mxu0 0.0
    %1556 = vmatprep.subr.mxu0 0.0
    %1557 = vmatpush1.msra.mxu0 0.0
    %1558 = vmatprep.subr.mxu0 0.0
    %1559 = vmatpush1.msra.mxu0 0.0
    %1560 = vmatprep.subr.mxu0 0.0
    %1561 = vmatpush1.msra.mxu0 0.0
    %1562 = vmatprep.subr.mxu0 0.0
    %1563 = vmatpush1.msra.mxu0 0.0
    %1564 = vmatprep.subr.mxu0 0.0
    %1565 = vmatpush1.msra.mxu0 0.0
    %1566 = vmatprep.subr.mxu0 0.0
    %1567 = vmatpush1.msra.mxu0 0.0
    %1568 = vmatprep.subr.mxu0 0.0
    %1569 = vmatpush1.msra.mxu0 0.0
    %1570 = vmatprep.subr.mxu0 0.0
    %1571 = vmatpush1.msra.mxu0 0.0
    %1572 = vmatprep.subr.mxu0 0.0
    %1573 = vmatpush1.msra.mxu0 0.0
    %1574 = vmatprep.subr.mxu0 0.0
    %1575 = vmatpush1.msra.mxu0 0.0
    %1576 = vmatprep.subr.mxu0 0.0
    %1577 = vmatpush1.msra.mxu0 0.0
    %1578 = vmatprep.subr.mxu0 0.0
    %1579 = vmatpush1.msra.mxu0 0.0
    %1580 = vmatprep.subr.mxu0 0.0
    %1581 = vmatpush1.msra.mxu0 0.0
    %1582 = vmatprep.subr.mxu0 0.0
    %1583 = vmatpush1.msra.mxu0 0.0
    %1584 = vmatprep.subr.mxu0 0.0
    %1585 = vmatpush1.msra.mxu0 0.0
    %1586 = vmatprep.subr.mxu0 0.0
    %1587 = vmatpush1.msra.mxu0 0.0
    %1588 = vmatprep.mubr.f32.mxu0 0.0
    %1589 = vmatmul.mubr.f32.gmra.mrb[0].mxu0 %v1522
    %v1590 = vpop.f32.mrb[0].mxu0
    %v1591 = vadd.f32 0.0, %v1590
    %v1592 = vpop.f32.mrb[0].mxu0
    %1593 = vdwg.mxu0
    %v1595 = vsel %vm475, %v1154, 0
    %1597 = vmatprep.subr.mxu0 0.0
    %1598 = vmatpush1.msra.mxu0 %v470
    %1599 = vmatprep.subr.mxu0 0.0
    %1600 = vmatpush1.msra.mxu0 0.0
    %1601 = vmatprep.subr.mxu0 0.0
    %1602 = vmatpush1.msra.mxu0 0.0
    %1603 = vmatprep.subr.mxu0 0.0
    %1604 = vmatpush1.msra.mxu0 0.0
    %1605 = vmatprep.subr.mxu0 0.0
    %1606 = vmatpush1.msra.mxu0 0.0
    %1607 = vmatprep.subr.mxu0 0.0
    %1608 = vmatpush1.msra.mxu0 0.0
    %1609 = vmatprep.subr.mxu0 0.0
    %1610 = vmatpush1.msra.mxu0 0.0
    %1611 = vmatprep.subr.mxu0 0.0
    %1612 = vmatpush1.msra.mxu0 0.0
    %1613 = vmatprep.subr.mxu0 0.0
    %1614 = vmatpush1.msra.mxu0 0.0
    %1615 = vmatprep.subr.mxu0 0.0
    %1616 = vmatpush1.msra.mxu0 0.0
    %1617 = vmatprep.subr.mxu0 0.0
    %1618 = vmatpush1.msra.mxu0 0.0
    %1619 = vmatprep.subr.mxu0 0.0
    %1620 = vmatpush1.msra.mxu0 0.0
    %1621 = vmatprep.subr.mxu0 0.0
    %1622 = vmatpush1.msra.mxu0 0.0
    %1623 = vmatprep.subr.mxu0 0.0
    %1624 = vmatpush1.msra.mxu0 0.0
    %1625 = vmatprep.subr.mxu0 0.0
    %1626 = vmatpush1.msra.mxu0 0.0
    %1627 = vmatprep.subr.mxu0 0.0
    %1628 = vmatpush1.msra.mxu0 0.0
    %1629 = vmatprep.subr.mxu0 0.0
    %1630 = vmatpush1.msra.mxu0 0.0
    %1631 = vmatprep.subr.mxu0 0.0
    %1632 = vmatpush1.msra.mxu0 0.0
    %1633 = vmatprep.subr.mxu0 0.0
    %1634 = vmatpush1.msra.mxu0 0.0
    %1635 = vmatprep.subr.mxu0 0.0
    %1636 = vmatpush1.msra.mxu0 0.0
    %1637 = vmatprep.subr.mxu0 0.0
    %1638 = vmatpush1.msra.mxu0 0.0
    %1639 = vmatprep.subr.mxu0 0.0
    %1640 = vmatpush1.msra.mxu0 0.0
    %1641 = vmatprep.subr.mxu0 0.0
    %1642 = vmatpush1.msra.mxu0 0.0
    %1643 = vmatprep.subr.mxu0 0.0
    %1644 = vmatpush1.msra.mxu0 0.0
    %1645 = vmatprep.subr.mxu0 0.0
    %1646 = vmatpush1.msra.mxu0 0.0
    %1647 = vmatprep.subr.mxu0 0.0
    %1648 = vmatpush1.msra.mxu0 0.0
    %1649 = vmatprep.subr.mxu0 0.0
    %1650 = vmatpush1.msra.mxu0 0.0
    %1651 = vmatprep.subr.mxu0 0.0
    %1652 = vmatpush1.msra.mxu0 0.0
    %1653 = vmatprep.subr.mxu0 0.0
    %1654 = vmatpush1.msra.mxu0 0.0
    %1655 = vmatprep.subr.mxu0 0.0
    %1656 = vmatpush1.msra.mxu0 0.0
    %1657 = vmatprep.subr.mxu0 0.0
    %1658 = vmatpush1.msra.mxu0 0.0
    %1659 = vmatprep.subr.mxu0 0.0
    %1660 = vmatpush1.msra.mxu0 0.0
    %1661 = vmatprep.mubr.f32.mxu0 0.0
    %1662 = vmatmul.mubr.f32.gmra.mrb[0].mxu0 %v1595
    %v1663 = vpop.f32.mrb[0].mxu0
    %v1664 = vadd.f32 0.0, %v1663
    %v1665 = vpop.f32.mrb[0].mxu0
    %1666 = vdwg.mxu0
    %v1668 = vsel %vm475, %v1155, 0
    %1670 = vmatprep.subr.mxu0 0.0
    %1671 = vmatpush1.msra.mxu0 %v472
    %1672 = vmatprep.subr.mxu0 0.0
    %1673 = vmatpush1.msra.mxu0 0.0
    %1674 = vmatprep.subr.mxu0 0.0
    %1675 = vmatpush1.msra.mxu0 0.0
    %1676 = vmatprep.subr.mxu0 0.0
    %1677 = vmatpush1.msra.mxu0 0.0
    %1678 = vmatprep.subr.mxu0 0.0
    %1679 = vmatpush1.msra.mxu0 0.0
    %1680 = vmatprep.subr.mxu0 0.0
    %1681 = vmatpush1.msra.mxu0 0.0
    %1682 = vmatprep.subr.mxu0 0.0
    %1683 = vmatpush1.msra.mxu0 0.0
    %1684 = vmatprep.subr.mxu0 0.0
    %1685 = vmatpush1.msra.mxu0 0.0
    %1686 = vmatprep.subr.mxu0 0.0
    %1687 = vmatpush1.msra.mxu0 0.0
    %1688 = vmatprep.subr.mxu0 0.0
    %1689 = vmatpush1.msra.mxu0 0.0
    %1690 = vmatprep.subr.mxu0 0.0
    %1691 = vmatpush1.msra.mxu0 0.0
    %1692 = vmatprep.subr.mxu0 0.0
    %1693 = vmatpush1.msra.mxu0 0.0
    %1694 = vmatprep.subr.mxu0 0.0
    %1695 = vmatpush1.msra.mxu0 0.0
    %1696 = vmatprep.subr.mxu0 0.0
    %1697 = vmatpush1.msra.mxu0 0.0
    %1698 = vmatprep.subr.mxu0 0.0
    %1699 = vmatpush1.msra.mxu0 0.0
    %1700 = vmatprep.subr.mxu0 0.0
    %1701 = vmatpush1.msra.mxu0 0.0
    %1702 = vmatprep.subr.mxu0 0.0
    %1703 = vmatpush1.msra.mxu0 0.0
    %1704 = vmatprep.subr.mxu0 0.0
    %1705 = vmatpush1.msra.mxu0 0.0
    %1706 = vmatprep.subr.mxu0 0.0
    %1707 = vmatpush1.msra.mxu0 0.0
    %1708 = vmatprep.subr.mxu0 0.0
    %1709 = vmatpush1.msra.mxu0 0.0
    %1710 = vmatprep.subr.mxu0 0.0
    %1711 = vmatpush1.msra.mxu0 0.0
    %1712 = vmatprep.subr.mxu0 0.0
    %1713 = vmatpush1.msra.mxu0 0.0
    %1714 = vmatprep.subr.mxu0 0.0
    %1715 = vmatpush1.msra.mxu0 0.0
    %1716 = vmatprep.subr.mxu0 0.0
    %1717 = vmatpush1.msra.mxu0 0.0
    %1718 = vmatprep.subr.mxu0 0.0
    %1719 = vmatpush1.msra.mxu0 0.0
    %1720 = vmatprep.subr.mxu0 0.0
    %1721 = vmatpush1.msra.mxu0 0.0
    %1722 = vmatprep.subr.mxu0 0.0
    %1723 = vmatpush1.msra.mxu0 0.0
    %1724 = vmatprep.subr.mxu0 0.0
    %1725 = vmatpush1.msra.mxu0 0.0
    %1726 = vmatprep.subr.mxu0 0.0
    %1727 = vmatpush1.msra.mxu0 0.0
    %1728 = vmatprep.subr.mxu0 0.0
    %1729 = vmatpush1.msra.mxu0 0.0
    %1730 = vmatprep.subr.mxu0 0.0
    %1731 = vmatpush1.msra.mxu0 0.0
    %1732 = vmatprep.subr.mxu0 0.0
    %1733 = vmatpush1.msra.mxu0 0.0
    %1734 = vmatprep.mubr.f32.mxu0 0.0
    %1735 = vmatmul.mubr.f32.gmra.mrb[0].mxu0 %v1668
    %v1736 = vpop.f32.mrb[0].mxu0
    %v1737 = vadd.f32 0.0, %v1736
    %v1738 = vpop.f32.mrb[0].mxu0
    %1739 = vdwg.mxu0
    %1742 = vrot.lane.b32.xlu0 %v1372, 8
    %v1743 = vpop.permute.xlu0 %1742
    %1744 = vrot.lane.b32.xlu0 %v1445, 8
    %v1745 = vpop.permute.xlu0 %1744
    %1750 = vrot.lane.b32.xlu0 %v1518, 16
    %v1751 = vpop.permute.xlu0 %1750
    %1752 = vrot.lane.b32.xlu0 %v1591, 16
    %v1753 = vpop.permute.xlu0 %1752
    %1758 = vrot.lane.b32.xlu0 %v1664, 24
    %v1759 = vpop.permute.xlu0 %1758
    %1760 = vrot.lane.b32.xlu0 %v1737, 24
    %v1761 = vpop.permute.xlu0 %1760
    %v1764 = vsel %vm475, %v1226, %v1743
    %v1765 = vsel %vm475, %v1299, %v1745
    %vm1766 = vcmask 130048
    %v1767 = vsel %vm1766, %v1764, %v1751
    %v1768 = vsel %vm1766, %v1765, %v1753
    %vm1769 = vcmask 195584
    %v1770 = vsel %vm1769, %v1767, %v1759
    %v1771 = vsel %vm1769, %v1768, %v1761
    %v1772 = vld [vmem:[#allocation4] sm:$0xff]
    %v1773 = vld [vmem:[#allocation4 + $0x8] sm:$0xff]
    %v1774 = vld [vmem:[#allocation4 + $0x10] sm:$0xff]
    %v1775 = vld [vmem:[#allocation4 + $0x18] sm:$0xff]
    %v1776 = vld [vmem:[%s8] sm:$0x1]
    %v1778 = vlaneseq
    %v1779 = vshrl.u32 %v1778, 7
    %v1780 = vsub.s32 0, %v1779
    %v1781 = vrot.slane %v1776, %v1780
    %v1784 = vsel %vm173, %v1770, 0
    %v1787 = vsel %vm173, %v1771, 0
    %1789 = vmatprep.subr.mxu0 0.0
    %1790 = vmatpush1.msra.mxu0 %v1772
    %1791 = vmatprep.subr.mxu0 0.0
    %1792 = vmatpush1.msra.mxu0 %v1773
    %1793 = vmatprep.subr.mxu0 0.0
    %1794 = vmatpush1.msra.mxu0 %v1774
    %1795 = vmatprep.subr.mxu0 0.0
    %1796 = vmatpush1.msra.mxu0 %v1775
    %1797 = vmatprep.subr.mxu0 0.0
    %1798 = vmatpush1.msra.mxu0 0.0
    %1799 = vmatprep.subr.mxu0 0.0
    %1800 = vmatpush1.msra.mxu0 0.0
    %1801 = vmatprep.subr.mxu0 0.0
    %1802 = vmatpush1.msra.mxu0 0.0
    %1803 = vmatprep.subr.mxu0 0.0
    %1804 = vmatpush1.msra.mxu0 0.0
    %1805 = vmatprep.subr.mxu0 0.0
    %1806 = vmatpush1.msra.mxu0 0.0
    %1807 = vmatprep.subr.mxu0 0.0
    %1808 = vmatpush1.msra.mxu0 0.0
    %1809 = vmatprep.subr.mxu0 0.0
    %1810 = vmatpush1.msra.mxu0 0.0
    %1811 = vmatprep.subr.mxu0 0.0
    %1812 = vmatpush1.msra.mxu0 0.0
    %1813 = vmatprep.subr.mxu0 0.0
    %1814 = vmatpush1.msra.mxu0 0.0
    %1815 = vmatprep.subr.mxu0 0.0
    %1816 = vmatpush1.msra.mxu0 0.0
    %1817 = vmatprep.subr.mxu0 0.0
    %1818 = vmatpush1.msra.mxu0 0.0
    %1819 = vmatprep.subr.mxu0 0.0
    %1820 = vmatpush1.msra.mxu0 0.0
    %1821 = vmatprep.subr.mxu0 0.0
    %1822 = vmatpush1.msra.mxu0 0.0
    %1823 = vmatprep.subr.mxu0 0.0
    %1824 = vmatpush1.msra.mxu0 0.0
    %1825 = vmatprep.subr.mxu0 0.0
    %1826 = vmatpush1.msra.mxu0 0.0
    %1827 = vmatprep.subr.mxu0 0.0
    %1828 = vmatpush1.msra.mxu0 0.0
    %1829 = vmatprep.subr.mxu0 0.0
    %1830 = vmatpush1.msra.mxu0 0.0
    %1831 = vmatprep.subr.mxu0 0.0
    %1832 = vmatpush1.msra.mxu0 0.0
    %1833 = vmatprep.subr.mxu0 0.0
    %1834 = vmatpush1.msra.mxu0 0.0
    %1835 = vmatprep.subr.mxu0 0.0
    %1836 = vmatpush1.msra.mxu0 0.0
    %1837 = vmatprep.subr.mxu0 0.0
    %1838 = vmatpush1.msra.mxu0 0.0
    %1839 = vmatprep.subr.mxu0 0.0
    %1840 = vmatpush1.msra.mxu0 0.0
    %1841 = vmatprep.subr.mxu0 0.0
    %1842 = vmatpush1.msra.mxu0 0.0
    %1843 = vmatprep.subr.mxu0 0.0
    %1844 = vmatpush1.msra.mxu0 0.0
    %1845 = vmatprep.subr.mxu0 0.0
    %1846 = vmatpush1.msra.mxu0 0.0
    %1847 = vmatprep.subr.mxu0 0.0
    %1848 = vmatpush1.msra.mxu0 0.0
    %1849 = vmatprep.subr.mxu0 0.0
    %1850 = vmatpush1.msra.mxu0 0.0
    %1851 = vmatprep.subr.mxu0 0.0
    %1852 = vmatpush1.msra.mxu0 0.0
    %1853 = vmatprep.mubr.f32.mxu0 0.0
    %1854 = vmatmul.mubr.f32.gmra.mrb[0].mxu0 %v1784
    %v1855 = vpop.f32.mrb[0].mxu0
    %v1856 = vadd.f32 %v1781, %v1855
    %v1857 = vpop.f32.mrb[0].mxu0
    %1858 = vmatprep.mubr.f32.mxu0 0.0
    %1859 = vmatmul.mubr.f32.gmra.mrb[0].mxu0 %v1787
    %v1860 = vpop.f32.mrb[0].mxu0
    %v1861 = vadd.f32 %v1781, %v1860
    %v1862 = vpop.f32.mrb[0].mxu0
    %1863 = vdwg.mxu0
    %v1864 = vadd.f32 %v145, %v1856
    %v1865 = vadd.f32 %v160, %v1861
    %v1866 = vld [vmem:[%s9] sm:$0x1]
    %v1867 = vld [vmem:[%s10] sm:$0x1]
    %v1868 = vsel %vm173, %v1864, 0.0
    %1869 = vadd.xlane.f32.xlu0 %v1868
    %v1870 = vpop.xlane.xlu0 %1869
    %v1871 = vsel %vm173, %v1865, 0.0
    %1872 = vadd.xlane.f32.xlu0 %v1871
    %v1873 = vpop.xlane.xlu0 %1872
    %v1874 = vrcp.pop 32.0
    %v1875 = vmul.f32 %v1870, %v1874
    %v1876 = vmul.f32 %v1873, %v1874
    %v1877 = vsub.f32 %v1864, %v1875
    %v1878 = vsub.f32 %v1865, %v1876
    %v1879 = vmul.f32 %v1877, %v1877
    %v1880 = vmul.f32 %v1878, %v1878
    %v1881 = vsel %vm173, %v1879, 0.0
    %1882 = vadd.xlane.f32.xlu0 %v1881
    %v1883 = vpop.xlane.xlu0 %1882
    %v1884 = vsel %vm173, %v1880, 0.0
    %1885 = vadd.xlane.f32.xlu0 %v1884
    %v1886 = vpop.xlane.xlu0 %1885
    %v1887 = vmul.f32 %v1883, %v1874
    %v1888 = vmul.f32 %v1886, %v1874
    %v1889 = vadd.f32 %v1887, 1e-05
    %v1890 = vadd.f32 %v1888, 1e-05
    %v1891 = vrsqrt.pop %v1889
    %v1892 = vrsqrt.pop %v1890
    %v1893 = vmul.f32 %v1877, %v1891
    %v1894 = vmul.f32 %v1878, %v1892
    %v1896 = vlaneseq
    %v1897 = vshrl.u32 %v1896, 7
    %v1898 = vsub.s32 0, %v1897
    %v1899 = vrot.slane %v1866, %v1898
    %v1901 = vmul.f32 %v1893, %v1899
    %v1902 = vmul.f32 %v1894, %v1899
    %v1904 = vlaneseq
    %v1905 = vshrl.u32 %v1904, 7
    %v1906 = vsub.s32 0, %v1905
    %v1907 = vrot.slane %v1867, %v1906
    %v1909 = vadd.f32 %v1901, %v1907
    %v1910 = vadd.f32 %v1902, %v1907
    %v1911 = vld [vmem:[#allocation6] sm:$0xff]
    %v1912 = vld [vmem:[#allocation6 + $0x8] sm:$0xff]
    %v1913 = vld [vmem:[#allocation6 + $0x10] sm:$0xff]
    %v1914 = vld [vmem:[#allocation6 + $0x18] sm:$0xff]
    %v1915 = vld [vmem:[#allocation7] sm:$0x1]
    %v1917 = vlaneseq
    %v1918 = vshrl.u32 %v1917, 7
    %v1919 = vsub.s32 0, %v1918
    %v1920 = vrot.slane %v1915, %v1919
    %v1923 = vsel %vm173, %v1909, 0
    %v1926 = vsel %vm173, %v1910, 0
    %1928 = vmatprep.subr.mxu0 0.0
    %1929 = vmatpush1.msra.mxu0 %v1911
    %1930 = vmatprep.subr.mxu0 0.0
    %1931 = vmatpush1.msra.mxu0 %v1912
    %1932 = vmatprep.subr.mxu0 0.0
    %1933 = vmatpush1.msra.mxu0 %v1913
    %1934 = vmatprep.subr.mxu0 0.0
    %1935 = vmatpush1.msra.mxu0 %v1914
    %1936 = vmatprep.subr.mxu0 0.0
    %1937 = vmatpush1.msra.mxu0 0.0
    %1938 = vmatprep.subr.mxu0 0.0
    %1939 = vmatpush1.msra.mxu0 0.0
    %1940 = vmatprep.subr.mxu0 0.0
    %1941 = vmatpush1.msra.mxu0 0.0
    %1942 = vmatprep.subr.mxu0 0.0
    %1943 = vmatpush1.msra.mxu0 0.0
    %1944 = vmatprep.subr.mxu0 0.0
    %1945 = vmatpush1.msra.mxu0 0.0
    %1946 = vmatprep.subr.mxu0 0.0
    %1947 = vmatpush1.msra.mxu0 0.0
    %1948 = vmatprep.subr.mxu0 0.0
    %1949 = vmatpush1.msra.mxu0 0.0
    %1950 = vmatprep.subr.mxu0 0.0
    %1951 = vmatpush1.msra.mxu0 0.0
    %1952 = vmatprep.subr.mxu0 0.0
    %1953 = vmatpush1.msra.mxu0 0.0
    %1954 = vmatprep.subr.mxu0 0.0
    %1955 = vmatpush1.msra.mxu0 0.0
    %1956 = vmatprep.subr.mxu0 0.0
    %1957 = vmatpush1.msra.mxu0 0.0
    %1958 = vmatprep.subr.mxu0 0.0
    %1959 = vmatpush1.msra.mxu0 0.0
    %1960 = vmatprep.subr.mxu0 0.0
    %1961 = vmatpush1.msra.mxu0 0.0
    %1962 = vmatprep.subr.mxu0 0.0
    %1963 = vmatpush1.msra.mxu0 0.0
    %1964 = vmatprep.subr.mxu0 0.0
    %1965 = vmatpush1.msra.mxu0 0.0
    %1966 = vmatprep.subr.mxu0 0.0
    %1967 = vmatpush1.msra.mxu0 0.0
    %1968 = vmatprep.subr.mxu0 0.0
    %1969 = vmatpush1.msra.mxu0 0.0
    %1970 = vmatprep.subr.mxu0 0.0
    %1971 = vmatpush1.msra.mxu0 0.0
    %1972 = vmatprep.subr.mxu0 0.0
    %1973 = vmatpush1.msra.mxu0 0.0
    %1974 = vmatprep.subr.mxu0 0.0
    %1975 = vmatpush1.msra.mxu0 0.0
    %1976 = vmatprep.subr.mxu0 0.0
    %1977 = vmatpush1.msra.mxu0 0.0
    %1978 = vmatprep.subr.mxu0 0.0
    %1979 = vmatpush1.msra.mxu0 0.0
    %1980 = vmatprep.subr.mxu0 0.0
    %1981 = vmatpush1.msra.mxu0 0.0
    %1982 = vmatprep.subr.mxu0 0.0
    %1983 = vmatpush1.msra.mxu0 0.0
    %1984 = vmatprep.subr.mxu0 0.0
    %1985 = vmatpush1.msra.mxu0 0.0
    %1986 = vmatprep.subr.mxu0 0.0
    %1987 = vmatpush1.msra.mxu0 0.0
    %1988 = vmatprep.subr.mxu0 0.0
    %1989 = vmatpush1.msra.mxu0 0.0
    %1990 = vmatprep.subr.mxu0 0.0
    %1991 = vmatpush1.msra.mxu0 0.0
    %1992 = vmatprep.mubr.f32.mxu0 0.0
    %1993 = vmatmul.mubr.f32.gmra.mrb[0].mxu0 %v1923
    %v1994 = vpop.f32.mrb[0].mxu0
    %v1995 = vadd.f32 %v1920, %v1994
    %v1996 = vpop.f32.mrb[0].mxu0
    %1997 = vmatprep.mubr.f32.mxu0 0.0
    %1998 = vmatmul.mubr.f32.gmra.mrb[0].mxu0 %v1926
    %v1999 = vpop.f32.mrb[0].mxu0
    %v2000 = vadd.f32 %v1920, %v1999
    %v2001 = vpop.f32.mrb[0].mxu0
    %2002 = vdwg.mxu0
    %v2003 = vmax.f32 %v1995, 0.0
    %v2004 = vmax.f32 %v2000, 0.0
    %v2005 = vld [vmem:[%s13] sm:$0xff]
    %v2006 = vld [vmem:[%s13 + $0x8] sm:$0xff]
    %v2007 = vld [vmem:[%s13 + $0x10] sm:$0xff]
    %v2008 = vld [vmem:[%s13 + $0x18] sm:$0xff]
    %v2009 = vld [vmem:[%s13 + $0x20] sm:$0xff]
    %v2010 = vld [vmem:[%s13 + $0x28] sm:$0xff]
    %v2011 = vld [vmem:[%s13 + $0x30] sm:$0xff]
    %v2012 = vld [vmem:[%s13 + $0x38] sm:$0xff]
    %v2013 = vld [vmem:[%s14] sm:$0x1]
    %v2015 = vlaneseq
    %v2016 = vshrl.u32 %v2015, 7
    %v2017 = vsub.s32 0, %v2016
    %v2018 = vrot.slane %v2013, %v2017
    %vm2020 = vcmask 523264
    %v2022 = vsel %vm2020, %v2003, 0
    %v2025 = vsel %vm2020, %v2004, 0
    %2027 = vmatprep.subr.mxu0 0.0
    %2028 = vmatpush1.msra.mxu0 %v2005
    %2029 = vmatprep.subr.mxu0 0.0
    %2030 = vmatpush1.msra.mxu0 %v2006
    %2031 = vmatprep.subr.mxu0 0.0
    %2032 = vmatpush1.msra.mxu0 %v2007
    %2033 = vmatprep.subr.mxu0 0.0
    %2034 = vmatpush1.msra.mxu0 %v2008
    %2035 = vmatprep.subr.mxu0 0.0
    %2036 = vmatpush1.msra.mxu0 %v2009
    %2037 = vmatprep.subr.mxu0 0.0
    %2038 = vmatpush1.msra.mxu0 %v2010
    %2039 = vmatprep.subr.mxu0 0.0
    %2040 = vmatpush1.msra.mxu0 %v2011
    %2041 = vmatprep.subr.mxu0 0.0
    %2042 = vmatpush1.msra.mxu0 %v2012
    %2043 = vmatprep.subr.mxu0 0.0
    %2044 = vmatpush1.msra.mxu0 0.0
    %2045 = vmatprep.subr.mxu0 0.0
    %2046 = vmatpush1.msra.mxu0 0.0
    %2047 = vmatprep.subr.mxu0 0.0
    %2048 = vmatpush1.msra.mxu0 0.0
    %2049 = vmatprep.subr.mxu0 0.0
    %2050 = vmatpush1.msra.mxu0 0.0
    %2051 = vmatprep.subr.mxu0 0.0
    %2052 = vmatpush1.msra.mxu0 0.0
    %2053 = vmatprep.subr.mxu0 0.0
    %2054 = vmatpush1.msra.mxu0 0.0
    %2055 = vmatprep.subr.mxu0 0.0
    %2056 = vmatpush1.msra.mxu0 0.0
    %2057 = vmatprep.subr.mxu0 0.0
    %2058 = vmatpush1.msra.mxu0 0.0
    %2059 = vmatprep.subr.mxu0 0.0
    %2060 = vmatpush1.msra.mxu0 0.0
    %2061 = vmatprep.subr.mxu0 0.0
    %2062 = vmatpush1.msra.mxu0 0.0
    %2063 = vmatprep.subr.mxu0 0.0
    %2064 = vmatpush1.msra.mxu0 0.0
    %2065 = vmatprep.subr.mxu0 0.0
    %2066 = vmatpush1.msra.mxu0 0.0
    %2067 = vmatprep.subr.mxu0 0.0
    %2068 = vmatpush1.msra.mxu0 0.0
    %2069 = vmatprep.subr.mxu0 0.0
    %2070 = vmatpush1.msra.mxu0 0.0
    %2071 = vmatprep.subr.mxu0 0.0
    %2072 = vmatpush1.msra.mxu0 0.0
    %2073 = vmatprep.subr.mxu0 0.0
    %2074 = vmatpush1.msra.mxu0 0.0
    %2075 = vmatprep.subr.mxu0 0.0
    %2076 = vmatpush1.msra.mxu0 0.0
    %2077 = vmatprep.subr.mxu0 0.0
    %2078 = vmatpush1.msra.mxu0 0.0
    %2079 = vmatprep.subr.mxu0 0.0
    %2080 = vmatpush1.msra.mxu0 0.0
    %2081 = vmatprep.subr.mxu0 0.0
    %2082 = vmatpush1.msra.mxu0 0.0
    %2083 = vmatprep.subr.mxu0 0.0
    %2084 = vmatpush1.msra.mxu0 0.0
    %2085 = vmatprep.subr.mxu0 0.0
    %2086 = vmatpush1.msra.mxu0 0.0
    %2087 = vmatprep.subr.mxu0 0.0
    %2088 = vmatpush1.msra.mxu0 0.0
    %2089 = vmatprep.subr.mxu0 0.0
    %2090 = vmatpush1.msra.mxu0 0.0
    %2091 = vmatprep.mubr.f32.mxu0 0.0
    %2092 = vmatmul.mubr.f32.gmra.mrb[0].mxu0 %v2022
    %v2093 = vpop.f32.mrb[0].mxu0
    %v2094 = vadd.f32 %v2018, %v2093
    %v2095 = vpop.f32.mrb[0].mxu0
    %2096 = vmatprep.mubr.f32.mxu0 0.0
    %2097 = vmatmul.mubr.f32.gmra.mrb[0].mxu0 %v2025
    %v2098 = vpop.f32.mrb[0].mxu0
    %v2099 = vadd.f32 %v2018, %v2098
    %v2100 = vpop.f32.mrb[0].mxu0
    %2101 = vdwg.mxu0
    %v2102 = vadd.f32 %v1909, %v2094
    %v2103 = vadd.f32 %v1910, %v2099
    %v2104 = vld [vmem:[%s15] sm:$0x1]
    %v2105 = vld [vmem:[%s16] sm:$0x1]
    %v2106 = vsel %vm173, %v2102, 0.0
    %2107 = vadd.xlane.f32.xlu0 %v2106
    %v2108 = vpop.xlane.xlu0 %2107
    %v2109 = vsel %vm173, %v2103, 0.0
    %2110 = vadd.xlane.f32.xlu0 %v2109
    %v2111 = vpop.xlane.xlu0 %2110
    %v2112 = vmul.f32 %v2108, %v1874
    %v2113 = vmul.f32 %v2111, %v1874
    %v2114 = vsub.f32 %v2102, %v2112
    %v2115 = vsub.f32 %v2103, %v2113
    %v2116 = vmul.f32 %v2114, %v2114
    %v2117 = vmul.f32 %v2115, %v2115
    %v2118 = vsel %vm173, %v2116, 0.0
    %2119 = vadd.xlane.f32.xlu0 %v2118
    %v2120 = vpop.xlane.xlu0 %2119
    %v2121 = vsel %vm173, %v2117, 0.0
    %2122 = vadd.xlane.f32.xlu0 %v2121
    %v2123 = vpop.xlane.xlu0 %2122
    %v2124 = vmul.f32 %v2120, %v1874
    %v2125 = vmul.f32 %v2123, %v1874
    %v2126 = vadd.f32 %v2124, 1e-05
    %v2127 = vadd.f32 %v2125, 1e-05
    %v2128 = vrsqrt.pop %v2126
    %v2129 = vrsqrt.pop %v2127
    %v2130 = vmul.f32 %v2114, %v2128
    %v2131 = vmul.f32 %v2115, %v2129
    %v2133 = vlaneseq
    %v2134 = vshrl.u32 %v2133, 7
    %v2135 = vsub.s32 0, %v2134
    %v2136 = vrot.slane %v2104, %v2135
    %v2138 = vmul.f32 %v2130, %v2136
    %v2139 = vmul.f32 %v2131, %v2136
    %v2141 = vlaneseq
    %v2142 = vshrl.u32 %v2141, 7
    %v2143 = vsub.s32 0, %v2142
    %v2144 = vrot.slane %v2105, %v2143
    %v2146 = vadd.f32 %v2138, %v2144
    %v2147 = vadd.f32 %v2139, %v2144
    %2149 = vrot.lane.b32.xlu0 %v2147, 32
    %v2150 = vpop.permute.xlu0 %2149
    %v2152 = vsel %vm173, %v2146, %v2150
    %2153 = vst.msk [vmem:[%s17] sm:$0xff] %vm2020, %v2152
    // Predicated region
    $region86: #{transformer_layer.1} parent=1 // pred_check
      _
    $region87: #{transformer_layer.1} parent=1 // pred_check_branch
      %2155 = sbr.rel (0) target = $region89
    $region88: #{transformer_layer.1} parent=1 // pred_region
      _
    $region89: #{transformer_layer.1} parent=1 // pred_fallthru
      _
    // Predicated region
    $region90: #{transformer_layer.1} parent=1 // pred_check
      _
    $region91: #{transformer_layer.1} parent=1 // pred_check_branch
      %2157 = sbr.rel (0) target = $region93
    $region92: #{transformer_layer.1} parent=1 // pred_region
      _
    $region93: #{transformer_layer.1} parent=1 // pred_fallthru
      _
    %2158 = vsyncpa [#allocation3], 1
    %2159 = vsyncpa [#allocation5], 1
    %2160 = vsyncpa [#allocation8], 1

</llo_original>
